<compile_context>
chip_gen: v7x
topology: tpu7x:2x2x1
jax: 0.10.0
libtpu: 0.0.40
codegen_flags: <defaults>
</compile_context>

<pallas_src>
import functools

import jax
import jax.numpy as jnp
import numpy as np
from jax import lax
from jax.experimental import pallas as pl
from jax.experimental.pallas import tpu as pltpu


def _round_up(x, m):
    return ((x + m - 1) // m) * m


def _vmem_capacity_bytes():
    try:
        return int(pltpu.get_tpu_info().vmem_capacity_bytes)
    except Exception:
        return 64 * 1024 * 1024  # conservative fallback (v7x per-core VMEM)


_VMEM_CAP = _vmem_capacity_bytes()
# Leave headroom for compiler-internal scratch: ~48 MiB on v7x (64 MiB VMEM),
# up to ~96 MiB on v5e/v6e (128 MiB VMEM).
_VMEM_LIMIT = min(int(_VMEM_CAP * 0.75), 96 * 1024 * 1024)


def _pick_tile(n, cap):
    """Largest multiple of 128 that divides n (n is a multiple of 128), <= cap."""
    t = max(128, (min(cap, n) // 128) * 128)
    while n % t:
        t -= 128
    return t


def _pick_row_tile(n, cap):
    """Like _pick_tile but prefer an even row-tile count >= 2 so the 'parallel'
    row axis can split across both v7x TensorCores."""
    best = None
    t = max(128, (min(cap, n) // 128) * 128)
    while t >= 128:
        if n % t == 0:
            if best is None:
                best = t
            cnt = n // t
            if cnt >= 2 and cnt % 2 == 0:
                return t
        t -= 128
    return best if best is not None else 128


# ----------------------------------------------------------------------------
# Propagation, fast path: Graph + activations fully VMEM-resident, all layers
# inside ONE pallas_call (Graph is read from HBM exactly once).
# ----------------------------------------------------------------------------
def _propagate_resident_kernel(g_ref, e0_ref, out_ref, cur_ref, *, n_layers):
    cur_ref[...] = e0_ref[...]
    out_ref[...] = e0_ref[...]
    for _ in range(n_layers):           # static, small trip count (unrolled)
        nxt = jnp.dot(g_ref[...], cur_ref[...].astype(jnp.bfloat16),
                      preferred_element_type=jnp.float32)
        cur_ref[...] = nxt
        out_ref[...] = out_ref[...] + nxt
    out_ref[...] = out_ref[...] * (1.0 / float(n_layers + 1))


def _propagate_resident(graph_bf16, e0_f32, n_layers):
    np_, dp = e0_f32.shape
    return pl.pallas_call(
        functools.partial(_propagate_resident_kernel, n_layers=n_layers),
        out_shape=jax.ShapeDtypeStruct((np_, dp), jnp.float32),
        grid=(1,),
        in_specs=[pl.BlockSpec((np_, np_), lambda i: (0, 0)),   # Graph (bf16)
                  pl.BlockSpec((np_, dp), lambda i: (0, 0))],   # E0    (f32)
        out_specs=pl.BlockSpec((np_, dp), lambda i: (0, 0)),
        scratch_shapes=[pltpu.VMEM((np_, dp), jnp.float32)],
        compiler_params=pltpu.CompilerParams(
            dimension_semantics=("arbitrary",),
            vmem_limit_bytes=_VMEM_LIMIT),
    )(graph_bf16, e0_f32)


# ----------------------------------------------------------------------------
# Propagation, tiled path (large graphs): one pallas_call per layer.
#   * (tm, tk) bf16 Graph tiles on the MXU, f32 VMEM accumulator.
#   * running mean-sum fused in as a second output aliased to its input.
#   * HBM store gated to the last k step.
#   * activation kept VMEM-resident (DMA'd once per layer) when it fits.
# ----------------------------------------------------------------------------
def _layer_tiled_kernel(g_ref, x_ref, sum_ref, nxt_ref, sumo_ref, acc_ref,
                        *, tk, x_resident):
    k = pl.program_id(1)

    @pl.when(k == 0)
    def _():
        acc_ref[...] = jnp.zeros_like(acc_ref)

    if x_resident:
        start = pl.multiple_of(k * tk, 128)
        x = x_ref[pl.ds(start, tk), :]
    else:
        x = x_ref[...]
    acc_ref[...] += jnp.dot(g_ref[...], x.astype(jnp.bfloat16),
                            preferred_element_type=jnp.float32)

    @pl.when(k == pl.num_programs(1) - 1)
    def _():
        nxt = acc_ref[...]
        nxt_ref[...] = nxt                      # cur_{l+1}
        sumo_ref[...] = sum_ref[...] + nxt      # running sum (aliased in HBM)


def _make_layer_tiled(np_, dp, tm, tk, x_resident):
    if x_resident:
        # Full-extent block, constant index map -> DMA'd once per layer.
        x_spec = pl.BlockSpec((np_, dp), lambda i, k: (0, 0))
    else:
        x_spec = pl.BlockSpec((tk, dp), lambda i, k: (k, 0))
    kernel = functools.partial(_layer_tiled_kernel, tk=tk, x_resident=x_resident)
    return pl.pallas_call(
        kernel,
        out_shape=(jax.ShapeDtypeStruct((np_, dp), jnp.float32),   # cur_{l+1}
                   jax.ShapeDtypeStruct((np_, dp), jnp.float32)),  # running sum
        grid_spec=pltpu.PrefetchScalarGridSpec(
            num_scalar_prefetch=0,
            grid=(np_ // tm, np_ // tk),
            in_specs=[
                pl.BlockSpec((tm, tk), lambda i, k: (i, k)),   # Graph tile bf16
                x_spec,                                        # cur (f32)
                pl.BlockSpec((tm, dp), lambda i, k: (i, 0)),   # running sum in
            ],
            out_specs=[
                pl.BlockSpec((tm, dp), lambda i, k: (i, 0)),
                pl.BlockSpec((tm, dp), lambda i, k: (i, 0)),
            ],
            scratch_shapes=[pltpu.VMEM((tm, dp), jnp.float32)],
        ),
        input_output_aliases={2: 1},   # running sum updated in place
        compiler_params=pltpu.CompilerParams(
            dimension_semantics=("parallel", "arbitrary"),
            vmem_limit_bytes=_VMEM_LIMIT),
    )


def lightgcn_propagate_tiled(graph_bf16, e0_f32, n_layers, *,
                             tm=None, tk=None, x_resident=None):
    np_, dp = e0_f32.shape
    if tm is None:
        tm = _pick_row_tile(np_, 1024)
    if tk is None:
        tk = _pick_tile(np_, 2048)
    if x_resident is None:
        x_resident = (2 * np_ * dp * 4) <= (_VMEM_LIMIT // 3)
    layer = _make_layer_tiled(np_, dp, tm, tk, x_resident)
    cur, run_sum = e0_f32, e0_f32
    for _ in range(n_layers):     # layer l+1 needs the full layer-l result
        cur, run_sum = layer(graph_bf16, cur, run_sum)
    return run_sum * (1.0 / float(n_layers + 1))


def lightgcn_propagate(graph_bf16, e0_f32, n_layers):
    np_, dp = e0_f32.shape
    resident_need = 2 * (np_ * np_ * 2) + 6 * (np_ * dp * 4) + (4 << 20)
    if resident_need <= _VMEM_LIMIT:
        return _propagate_resident(graph_bf16, e0_f32, n_layers)
    return lightgcn_propagate_tiled(graph_bf16, e0_f32, n_layers)


# ----------------------------------------------------------------------------
# BPR loss: dense XLA gathers in the wrapper, batch-tiled loss kernel with a
# (1,1) accumulator output across the batch grid axis.
# ----------------------------------------------------------------------------
def _bpr_loss_kernel(u_ref, p_ref, n_ref, u0_ref, p0_ref, n0_ref, o_ref,
                     *, tb, batch, weight_decay):
    b = pl.program_id(0)

    @pl.when(b == 0)
    def _():
        o_ref[...] = jnp.zeros_like(o_ref)

    row = b * tb + lax.broadcasted_iota(jnp.int32, (tb, 1), 0)
    valid = (row < batch).astype(jnp.float32)                     # (tb, 1)

    u = u_ref[...]
    x = (jnp.sum(u * n_ref[...], axis=1, keepdims=True)
         - jnp.sum(u * p_ref[...], axis=1, keepdims=True))        # (tb, 1)
    # Numerically-stable softplus (matches F.softplus for large |x|).
    softplus = jnp.maximum(x, 0.0) + jnp.log1p(jnp.exp(-jnp.abs(x)))
    reg = 0.5 * (jnp.sum(valid * (u0_ref[...] * u0_ref[...]))
                 + jnp.sum(valid * (p0_ref[...] * p0_ref[...]))
                 + jnp.sum(valid * (n0_ref[...] * n0_ref[...])))
    contrib = (jnp.sum(valid * softplus) + weight_decay * reg) * (1.0 / float(batch))
    o_ref[...] = o_ref[...] + contrib[None, None]


def bpr_loss(light_out, user_emb, item_emb, users, pos_items, neg_items,
             weight_decay, num_users):
    B = users.shape[0]
    dp = light_out.shape[1]
    d = user_emb.shape[1]
    tb = min(256, _round_up(B, 8))
    bp = _round_up(B, tb)
    pad = bp - B
    users_p = jnp.pad(users, (0, pad))
    pos_p = jnp.pad(pos_items, (0, pad))
    neg_p = jnp.pad(neg_items, (0, pad))

    u = jnp.take(light_out, users_p, axis=0)
    p = jnp.take(light_out, num_users + pos_p, axis=0)
    n = jnp.take(light_out, num_users + neg_p, axis=0)

    def pad_cols(x):
        return jnp.pad(x, ((0, 0), (0, dp - d)))   # zero cols -> zero reg term
    u0 = pad_cols(jnp.take(user_emb, users_p, axis=0))
    p0 = pad_cols(jnp.take(item_emb, pos_p, axis=0))
    n0 = pad_cols(jnp.take(item_emb, neg_p, axis=0))

    kernel = functools.partial(_bpr_loss_kernel, tb=tb, batch=B,
                               weight_decay=float(weight_decay))
    spec = pl.BlockSpec((tb, dp), lambda b: (b, 0))
    out = pl.pallas_call(
        kernel,
        out_shape=jax.ShapeDtypeStruct((1, 1), jnp.float32),
        grid=(bp // tb,),
        in_specs=[spec] * 6,
        out_specs=pl.BlockSpec((1, 1), lambda b: (0, 0)),
        # (1,1) accumulator: keep this axis "arbitrary" (never "parallel").
        compiler_params=pltpu.CompilerParams(
            dimension_semantics=("arbitrary",)),
    )(u, p, n, u0, p0, n0)
    return out[0, 0]


# ----------------------------------------------------------------------------
# Setup + full LightGCN forward
# ----------------------------------------------------------------------------
def lightgcn_prepare_graph(graph, num_users, num_items):
    """One-time setup: pad Graph to an (8,128)-clean square and cast to bf16.
    Hoisted out of the per-step forward (O(N^2) HBM traffic paid once)."""
    n = num_users + num_items
    np_ = _round_up(n, 128)
    graph_pad = jnp.zeros((np_, np_), jnp.float32).at[:n, :n].set(graph)
    return graph_pad.astype(jnp.bfloat16)


def _lightgcn_forward_impl(graph_bf16, user_emb, item_emb, users, pos_items,
                           neg_items, *, n_layers, weight_decay, num_users,
                           num_items, emb_dim):
    n = num_users + num_items
    np_ = graph_bf16.shape[0]
    dp = _round_up(emb_dim, 128)
    # Padding the (N, d) embedding tables is O(N*128) — negligible, and has to
    # be redone per step anyway (the embeddings are the trainable parameters).
    e0 = jnp.concatenate([user_emb, item_emb], axis=0)
    e0_pad = jnp.zeros((np_, dp), jnp.float32).at[:n, :emb_dim].set(e0)
    light_out = lightgcn_propagate(graph_bf16, e0_pad, n_layers)
    return bpr_loss(light_out, user_emb, item_emb, users, pos_items, neg_items,
                    weight_decay, num_users)


def make_lightgcn_forward(n_layers, weight_decay, num_users, num_items, emb_dim):
    return jax.jit(functools.partial(
        _lightgcn_forward_impl, n_layers=n_layers,
        weight_decay=float(weight_decay), num_users=num_users,
        num_items=num_items, emb_dim=emb_dim))


# ----------------------------------------------------------------------------
# Pure-JAX f32 reference (sanity check)
# ----------------------------------------------------------------------------
def lightgcn_forward_ref(user_emb, item_emb, graph, users, pos_items,
                         neg_items, n_layers, weight_decay):
    num_users = user_emb.shape[0]
    all_e = jnp.concatenate([user_emb, item_emb], axis=0)
    embeds = [all_e]
    cur = all_e
    for _ in range(n_layers):
        cur = graph @ cur
        embeds.append(cur)
    light_out = jnp.mean(jnp.stack(embeds, axis=1), axis=1)
    all_users, all_items = light_out[:num_users], light_out[num_users:]
    u = all_users[users]
    p = all_items[pos_items]
    n = all_items[neg_items]
    u0, p0, n0 = user_emb[users], item_emb[pos_items], item_emb[neg_items]
    reg = 0.5 * (jnp.sum(u0**2) + jnp.sum(p0**2) + jnp.sum(n0**2)) / users.shape[0]
    x = jnp.sum(u * n, axis=1) - jnp.sum(u * p, axis=1)
    softplus = jnp.maximum(x, 0.0) + jnp.log1p(jnp.exp(-jnp.abs(x)))
    return jnp.mean(softplus) + weight_decay * reg


def build_normalized_graph(key, num_users, num_items):
    """Dense D^{-1/2} A D^{-1/2} for a random bipartite interaction graph."""
    N = num_users + num_items
    r = (jax.random.uniform(key, (num_users, num_items)) < 0.15).astype(jnp.float32)
    adj = jnp.zeros((N, N), jnp.float32)
    adj = adj.at[:num_users, num_users:].set(r)
    adj = adj.at[num_users:, :num_users].set(r.T)
    deg = jnp.maximum(jnp.sum(adj, axis=1), 1.0)
    d_inv_sqrt = 1.0 / jnp.sqrt(deg)
    return adj * d_inv_sqrt[:, None] * d_inv_sqrt[None, :]


if __name__ == "__main__":
    # Small synthetic config (flags_obj stand-ins)
    num_users = 48
    num_items = 80
    embedding_dim = 32
    n_layers = 3
    weight_decay = 1e-4
    batch = 8

    key = jax.random.PRNGKey(0)
    k_u, k_i, k_g, k_bu, k_bp, k_bn, k_g2, k_e2 = jax.random.split(key, 8)

    # nn.init.normal_(std=0.1)
    user_emb = 0.1 * jax.random.normal(k_u, (num_users, embedding_dim), jnp.float32)
    item_emb = 0.1 * jax.random.normal(k_i, (num_items, embedding_dim), jnp.float32)
    graph = build_normalized_graph(k_g, num_users, num_items)

    users = jax.random.randint(k_bu, (batch,), 0, num_users, jnp.int32)
    pos_items = jax.random.randint(k_bp, (batch,), 0, num_items, jnp.int32)
    neg_items = jax.random.randint(k_bn, (batch,), 0, num_items, jnp.int32)

    # --- one-time setup (hoisted padding + bf16 cast), jitted forward ---
    graph_bf16 = lightgcn_prepare_graph(graph, num_users, num_items)
    forward = make_lightgcn_forward(n_layers, weight_decay, num_users,
                                    num_items, embedding_dim)

    loss = forward(graph_bf16, user_emb, item_emb, users, pos_items, neg_items)
    loss = jax.block_until_ready(loss)

    loss_ref = lightgcn_forward_ref(user_emb, item_emb, graph, users,
                                    pos_items, neg_items, n_layers,
                                    weight_decay)
    # Tolerance accounts for the bf16 Graph / bf16 MXU-input quantization.
    np.testing.assert_allclose(np.asarray(loss), np.asarray(loss_ref),
                               rtol=5e-3, atol=1e-3)

    # --- sanity-check the tiled (large-graph) propagation path on a small
    #     forced-tiled problem, both resident-x and streamed-x variants ---
    np2, dp2 = 256, 128
    g2 = (0.05 * jax.random.normal(k_g2, (np2, np2), jnp.float32)).astype(jnp.bfloat16)
    e2 = 0.1 * jax.random.normal(k_e2, (np2, dp2), jnp.float32)
    g2f = g2.astype(jnp.float32)
    cur, ref = e2, e2
    for _ in range(n_layers):
        cur = jnp.dot(g2f, cur.astype(jnp.bfloat16).astype(jnp.float32))
        ref = ref + cur
    ref = ref * (1.0 / float(n_layers + 1))
    for resident in (True, False):
        fn = jax.jit(functools.partial(lightgcn_propagate_tiled,
                                       n_layers=n_layers, tm=128, tk=128,
                                       x_resident=resident))
        out = jax.block_until_ready(fn(g2, e2))
        np.testing.assert_allclose(np.asarray(out), np.asarray(ref),
                                   rtol=1e-3, atol=1e-4)

    print("KERNEL_OK")
</pallas_src>

<mosaic_0001>
module attributes {stable_mosaic.version = 11 : i64} {
  func.func @_bpr_loss_kernel(%arg0: i32, %arg1: memref<8x128xf32, #tpu.memory_space<vmem>>, %arg2: memref<8x128xf32, #tpu.memory_space<vmem>>, %arg3: memref<8x128xf32, #tpu.memory_space<vmem>>, %arg4: memref<8x128xf32, #tpu.memory_space<vmem>>, %arg5: memref<8x128xf32, #tpu.memory_space<vmem>>, %arg6: memref<8x128xf32, #tpu.memory_space<vmem>>, %arg7: memref<1x1xf32, #tpu.memory_space<vmem>>) attributes {dimension_semantics = [#tpu.dimension_semantics<arbitrary>], iteration_bounds = array<i64: 1>, scalar_prefetch = 0 : i64, scratch_operands = 0 : i64, tpu.core_type = #tpu.core_type<tc>, window_params = [{transform_indices = @transform_0, window_bounds = array<i64: 8, 128>}, {transform_indices = @transform_1, window_bounds = array<i64: 8, 128>}, {transform_indices = @transform_2, window_bounds = array<i64: 8, 128>}, {transform_indices = @transform_3, window_bounds = array<i64: 8, 128>}, {transform_indices = @transform_4, window_bounds = array<i64: 8, 128>}, {transform_indices = @transform_5, window_bounds = array<i64: 8, 128>}, {pipeline_mode = #tpu.pipeline_mode<synchronous>, transform_indices = @transform_6, window_bounds = array<i64: 1, 1>}]} {
    %c0_i32 = arith.constant 0 : i32
    %0 = arith.cmpi eq, %arg0, %c0_i32 : i32
    %1 = arith.extui %0 : i1 to i32
    %c0_i32_0 = arith.constant 0 : i32
    %2 = arith.cmpi ne, %1, %c0_i32_0 : i32
    scf.if %2 {
      %cst_33 = arith.constant 0.000000e+00 : f32
      %71 = vector.broadcast %cst_33 : f32 to vector<1x1xf32>
      %c0_34 = arith.constant 0 : index
      %c0_35 = arith.constant 0 : index
      %72 = vector.load %arg7[%c0_34, %c0_35] : memref<1x1xf32, #tpu.memory_space<vmem>>, vector<1x1xf32>
      tpu.vector_store %arg7[%c0_34, %c0_35], %71 {strides = array<i32>} : memref<1x1xf32, #tpu.memory_space<vmem>>, vector<1x1xf32>,
    } else {
    }
    %c8_i32 = arith.constant 8 : i32
    %3 = arith.muli %arg0, %c8_i32 : i32
    %4 = tpu.iota {dimensions = array<i32: 0>} : vector<8x1xi32>
    %5 = vector.broadcast %3 : i32 to vector<8x1xi32>
    %6 = arith.addi %5, %4 : vector<8x1xi32>
    %c8_i32_1 = arith.constant 8 : i32
    %7 = vector.broadcast %c8_i32_1 : i32 to vector<8x1xi32>
    %8 = arith.cmpi slt, %6, %7 : vector<8x1xi32>
    %9 = arith.extui %8 : vector<8x1xi1> to vector<8x1xi32>
    %10 = arith.sitofp %9 : vector<8x1xi32> to vector<8x1xf32>
    %c0 = arith.constant 0 : index
    %c0_2 = arith.constant 0 : index
    %11 = vector.load %arg1[%c0, %c0_2] : memref<8x128xf32, #tpu.memory_space<vmem>>, vector<8x128xf32>
    %c0_3 = arith.constant 0 : index
    %c0_4 = arith.constant 0 : index
    %12 = vector.load %arg3[%c0_3, %c0_4] : memref<8x128xf32, #tpu.memory_space<vmem>>, vector<8x128xf32>
    %13 = arith.mulf %11, %12 : vector<8x128xf32>
    %cst = arith.constant dense<0.000000e+00> : vector<8xf32>
    %14 = vector.multi_reduction <add>, %13, %cst [1] : vector<8x128xf32> to vector<8xf32>
    %15 = vector.shape_cast %14 : vector<8xf32> to vector<8x1xf32>
    %c0_5 = arith.constant 0 : index
    %c0_6 = arith.constant 0 : index
    %16 = vector.load %arg2[%c0_5, %c0_6] : memref<8x128xf32, #tpu.memory_space<vmem>>, vector<8x128xf32>
    %17 = arith.mulf %11, %16 : vector<8x128xf32>
    %cst_7 = arith.constant dense<0.000000e+00> : vector<8xf32>
    %18 = vector.multi_reduction <add>, %17, %cst_7 [1] : vector<8x128xf32> to vector<8xf32>
    %19 = vector.shape_cast %18 : vector<8xf32> to vector<8x1xf32>
    %20 = arith.subf %15, %19 : vector<8x1xf32>
    %cst_8 = arith.constant 0.000000e+00 : f32
    %21 = vector.broadcast %cst_8 : f32 to vector<8x1xf32>
    %22 = arith.maximumf %20, %21 : vector<8x1xf32>
    %23 = math.absf %20 : vector<8x1xf32>
    %cst_9 = arith.constant 0.000000e+00 : f32
    %24 = vector.broadcast %cst_9 : f32 to vector<8x1xf32>
    %25 = arith.subf %24, %23 : vector<8x1xf32>
    %26 = math.exp %25 : vector<8x1xf32>
    %27 = math.log1p %26 : vector<8x1xf32>
    %28 = arith.addf %22, %27 : vector<8x1xf32>
    %c0_10 = arith.constant 0 : index
    %c0_11 = arith.constant 0 : index
    %29 = vector.load %arg4[%c0_10, %c0_11] : memref<8x128xf32, #tpu.memory_space<vmem>>, vector<8x128xf32>
    %c0_12 = arith.constant 0 : index
    %c0_13 = arith.constant 0 : index
    %30 = vector.load %arg4[%c0_12, %c0_13] : memref<8x128xf32, #tpu.memory_space<vmem>>, vector<8x128xf32>
    %31 = arith.mulf %29, %30 : vector<8x128xf32>
    %32 = vector.broadcast %10 : vector<8x1xf32> to vector<8x128xf32>
    %33 = arith.mulf %32, %31 : vector<8x128xf32>
    %34 = vector.shape_cast %33 : vector<8x128xf32> to vector<1x8x128xf32>
    %cst_14 = arith.constant dense<0.000000e+00> : vector<1xf32>
    %35 = vector.multi_reduction <add>, %34, %cst_14 [1, 2] : vector<1x8x128xf32> to vector<1xf32>
    %36 = vector.shape_cast %35 : vector<1xf32> to vector<1x1x1xf32>
    %37 = vector.extract %36[0, 0, 0] : f32 from vector<1x1x1xf32>
    %c0_15 = arith.constant 0 : index
    %c0_16 = arith.constant 0 : index
    %38 = vector.load %arg5[%c0_15, %c0_16] : memref<8x128xf32, #tpu.memory_space<vmem>>, vector<8x128xf32>
    %c0_17 = arith.constant 0 : index
    %c0_18 = arith.constant 0 : index
    %39 = vector.load %arg5[%c0_17, %c0_18] : memref<8x128xf32, #tpu.memory_space<vmem>>, vector<8x128xf32>
    %40 = arith.mulf %38, %39 : vector<8x128xf32>
    %41 = vector.broadcast %10 : vector<8x1xf32> to vector<8x128xf32>
    %42 = arith.mulf %41, %40 : vector<8x128xf32>
    %43 = vector.shape_cast %42 : vector<8x128xf32> to vector<1x8x128xf32>
    %cst_19 = arith.constant dense<0.000000e+00> : vector<1xf32>
    %44 = vector.multi_reduction <add>, %43, %cst_19 [1, 2] : vector<1x8x128xf32> to vector<1xf32>
    %45 = vector.shape_cast %44 : vector<1xf32> to vector<1x1x1xf32>
    %46 = vector.extract %45[0, 0, 0] : f32 from vector<1x1x1xf32>
    %47 = arith.addf %37, %46 : f32
    %c0_20 = arith.constant 0 : index
    %c0_21 = arith.constant 0 : index
    %48 = vector.load %arg6[%c0_20, %c0_21] : memref<8x128xf32, #tpu.memory_space<vmem>>, vector<8x128xf32>
    %c0_22 = arith.constant 0 : index
    %c0_23 = arith.constant 0 : index
    %49 = vector.load %arg6[%c0_22, %c0_23] : memref<8x128xf32, #tpu.memory_space<vmem>>, vector<8x128xf32>
    %50 = arith.mulf %48, %49 : vector<8x128xf32>
    %51 = vector.broadcast %10 : vector<8x1xf32> to vector<8x128xf32>
    %52 = arith.mulf %51, %50 : vector<8x128xf32>
    %53 = vector.shape_cast %52 : vector<8x128xf32> to vector<1x8x128xf32>
    %cst_24 = arith.constant dense<0.000000e+00> : vector<1xf32>
    %54 = vector.multi_reduction <add>, %53, %cst_24 [1, 2] : vector<1x8x128xf32> to vector<1xf32>
    %55 = vector.shape_cast %54 : vector<1xf32> to vector<1x1x1xf32>
    %56 = vector.extract %55[0, 0, 0] : f32 from vector<1x1x1xf32>
    %57 = arith.addf %47, %56 : f32
    %cst_25 = arith.constant 5.000000e-01 : f32
    %58 = arith.mulf %cst_25, %57 : f32
    %59 = arith.mulf %10, %28 : vector<8x1xf32>
    %60 = vector.shape_cast %59 : vector<8x1xf32> to vector<1x8x1xf32>
    %cst_26 = arith.constant dense<0.000000e+00> : vector<1xf32>
    %61 = vector.multi_reduction <add>, %60, %cst_26 [1, 2] : vector<1x8x1xf32> to vector<1xf32>
    %62 = vector.shape_cast %61 : vector<1xf32> to vector<1x1x1xf32>
    %63 = vector.extract %62[0, 0, 0] : f32 from vector<1x1x1xf32>
    %cst_27 = arith.constant 9.99999974E-5 : f32
    %64 = arith.mulf %cst_27, %58 : f32
    %65 = arith.addf %63, %64 : f32
    %cst_28 = arith.constant 1.250000e-01 : f32
    %66 = arith.mulf %65, %cst_28 : f32
    %c0_29 = arith.constant 0 : index
    %c0_30 = arith.constant 0 : index
    %67 = vector.load %arg7[%c0_29, %c0_30] : memref<1x1xf32, #tpu.memory_space<vmem>>, vector<1x1xf32>
    %68 = vector.broadcast %66 : f32 to vector<1x1xf32>
    %69 = arith.addf %67, %68 : vector<1x1xf32>
    %c0_31 = arith.constant 0 : index
    %c0_32 = arith.constant 0 : index
    %70 = vector.load %arg7[%c0_31, %c0_32] : memref<1x1xf32, #tpu.memory_space<vmem>>, vector<1x1xf32>
    tpu.vector_store %arg7[%c0_31, %c0_32], %69 {strides = array<i32>} : memref<1x1xf32, #tpu.memory_space<vmem>>, vector<1x1xf32>,
    return
  }
  func.func @transform_0(%arg0: i32) -> (i32, i32) {
    %c0_i32 = arith.constant 0 : i32
    %c0_i32_0 = arith.constant 0 : i32
    return %arg0, %c0_i32 : i32, i32
  }
  func.func @transform_1(%arg0: i32) -> (i32, i32) {
    %c0_i32 = arith.constant 0 : i32
    %c0_i32_0 = arith.constant 0 : i32
    return %arg0, %c0_i32 : i32, i32
  }
  func.func @transform_2(%arg0: i32) -> (i32, i32) {
    %c0_i32 = arith.constant 0 : i32
    %c0_i32_0 = arith.constant 0 : i32
    return %arg0, %c0_i32 : i32, i32
  }
  func.func @transform_3(%arg0: i32) -> (i32, i32) {
    %c0_i32 = arith.constant 0 : i32
    %c0_i32_0 = arith.constant 0 : i32
    return %arg0, %c0_i32 : i32, i32
  }
  func.func @transform_4(%arg0: i32) -> (i32, i32) {
    %c0_i32 = arith.constant 0 : i32
    %c0_i32_0 = arith.constant 0 : i32
    return %arg0, %c0_i32 : i32, i32
  }
  func.func @transform_5(%arg0: i32) -> (i32, i32) {
    %c0_i32 = arith.constant 0 : i32
    %c0_i32_0 = arith.constant 0 : i32
    return %arg0, %c0_i32 : i32, i32
  }
  func.func @transform_6(%arg0: i32) -> (i32, i32) {
    %c0_i32 = arith.constant 0 : i32
    %c0_i32_0 = arith.constant 0 : i32
    %c0_i32_1 = arith.constant 0 : i32
    return %c0_i32, %c0_i32_0 : i32, i32
  }
}

module attributes {stable_mosaic.version = 11 : i64} {
  func.func @_propagate_resident_kernel(%arg0: i32, %arg1: memref<128x128xbf16, #tpu.memory_space<vmem>>, %arg2: memref<128x128xf32, #tpu.memory_space<vmem>>, %arg3: memref<128x128xf32, #tpu.memory_space<vmem>>, %arg4: memref<128x128xf32, #tpu.memory_space<vmem>>) attributes {dimension_semantics = [#tpu.dimension_semantics<arbitrary>], iteration_bounds = array<i64: 1>, scalar_prefetch = 0 : i64, scratch_operands = 1 : i64, tpu.core_type = #tpu.core_type<tc>, window_params = [{pipeline_mode = #tpu.pipeline_mode<synchronous>, transform_indices = @transform_0, window_bounds = array<i64: 128, 128>}, {pipeline_mode = #tpu.pipeline_mode<synchronous>, transform_indices = @transform_1, window_bounds = array<i64: 128, 128>}, {pipeline_mode = #tpu.pipeline_mode<synchronous>, transform_indices = @transform_2, window_bounds = array<i64: 128, 128>}]} {
    %c0 = arith.constant 0 : index
    %c0_0 = arith.constant 0 : index
    %0 = vector.load %arg2[%c0, %c0_0] : memref<128x128xf32, #tpu.memory_space<vmem>>, vector<128x128xf32>
    %c0_1 = arith.constant 0 : index
    %c0_2 = arith.constant 0 : index
    %1 = vector.load %arg4[%c0_1, %c0_2] : memref<128x128xf32, #tpu.memory_space<vmem>>, vector<128x128xf32>
    tpu.vector_store %arg4[%c0_1, %c0_2], %0 {strides = array<i32>} : memref<128x128xf32, #tpu.memory_space<vmem>>, vector<128x128xf32>,
    %c0_3 = arith.constant 0 : index
    %c0_4 = arith.constant 0 : index
    %2 = vector.load %arg2[%c0_3, %c0_4] : memref<128x128xf32, #tpu.memory_space<vmem>>, vector<128x128xf32>
    %c0_5 = arith.constant 0 : index
    %c0_6 = arith.constant 0 : index
    %3 = vector.load %arg3[%c0_5, %c0_6] : memref<128x128xf32, #tpu.memory_space<vmem>>, vector<128x128xf32>
    tpu.vector_store %arg3[%c0_5, %c0_6], %2 {strides = array<i32>} : memref<128x128xf32, #tpu.memory_space<vmem>>, vector<128x128xf32>,
    %c0_7 = arith.constant 0 : index
    %c0_8 = arith.constant 0 : index
    %4 = vector.load %arg1[%c0_7, %c0_8] : memref<128x128xbf16, #tpu.memory_space<vmem>>, vector<128x128xbf16>
    %c0_9 = arith.constant 0 : index
    %c0_10 = arith.constant 0 : index
    %5 = vector.load %arg4[%c0_9, %c0_10] : memref<128x128xf32, #tpu.memory_space<vmem>>, vector<128x128xf32>
    %6 = arith.truncf %5 : vector<128x128xf32> to vector<128x128xbf16>
    %cst = arith.constant dense<0.000000e+00> : vector<128x128xf32>
    %7 = tpu.matmul %4, %6, %cst {dimension_numbers = #tpu.dot_dimension_numbers<[1], [0], [0], [1], [0, 0, 1, 1], [], []>} : vector<128x128xbf16>, vector<128x128xbf16>, vector<128x128xf32> -> vector<128x128xf32>
    %c0_11 = arith.constant 0 : index
    %c0_12 = arith.constant 0 : index
    %8 = vector.load %arg4[%c0_11, %c0_12] : memref<128x128xf32, #tpu.memory_space<vmem>>, vector<128x128xf32>
    tpu.vector_store %arg4[%c0_11, %c0_12], %7 {strides = array<i32>} : memref<128x128xf32, #tpu.memory_space<vmem>>, vector<128x128xf32>,
    %c0_13 = arith.constant 0 : index
    %c0_14 = arith.constant 0 : index
    %9 = vector.load %arg3[%c0_13, %c0_14] : memref<128x128xf32, #tpu.memory_space<vmem>>, vector<128x128xf32>
    %10 = arith.addf %9, %7 : vector<128x128xf32>
    %c0_15 = arith.constant 0 : index
    %c0_16 = arith.constant 0 : index
    %11 = vector.load %arg3[%c0_15, %c0_16] : memref<128x128xf32, #tpu.memory_space<vmem>>, vector<128x128xf32>
    tpu.vector_store %arg3[%c0_15, %c0_16], %10 {strides = array<i32>} : memref<128x128xf32, #tpu.memory_space<vmem>>, vector<128x128xf32>,
    %c0_17 = arith.constant 0 : index
    %c0_18 = arith.constant 0 : index
    %12 = vector.load %arg1[%c0_17, %c0_18] : memref<128x128xbf16, #tpu.memory_space<vmem>>, vector<128x128xbf16>
    %c0_19 = arith.constant 0 : index
    %c0_20 = arith.constant 0 : index
    %13 = vector.load %arg4[%c0_19, %c0_20] : memref<128x128xf32, #tpu.memory_space<vmem>>, vector<128x128xf32>
    %14 = arith.truncf %13 : vector<128x128xf32> to vector<128x128xbf16>
    %cst_21 = arith.constant dense<0.000000e+00> : vector<128x128xf32>
    %15 = tpu.matmul %12, %14, %cst_21 {dimension_numbers = #tpu.dot_dimension_numbers<[1], [0], [0], [1], [0, 0, 1, 1], [], []>} : vector<128x128xbf16>, vector<128x128xbf16>, vector<128x128xf32> -> vector<128x128xf32>
    %c0_22 = arith.constant 0 : index
    %c0_23 = arith.constant 0 : index
    %16 = vector.load %arg4[%c0_22, %c0_23] : memref<128x128xf32, #tpu.memory_space<vmem>>, vector<128x128xf32>
    tpu.vector_store %arg4[%c0_22, %c0_23], %15 {strides = array<i32>} : memref<128x128xf32, #tpu.memory_space<vmem>>, vector<128x128xf32>,
    %c0_24 = arith.constant 0 : index
    %c0_25 = arith.constant 0 : index
    %17 = vector.load %arg3[%c0_24, %c0_25] : memref<128x128xf32, #tpu.memory_space<vmem>>, vector<128x128xf32>
    %18 = arith.addf %17, %15 : vector<128x128xf32>
    %c0_26 = arith.constant 0 : index
    %c0_27 = arith.constant 0 : index
    %19 = vector.load %arg3[%c0_26, %c0_27] : memref<128x128xf32, #tpu.memory_space<vmem>>, vector<128x128xf32>
    tpu.vector_store %arg3[%c0_26, %c0_27], %18 {strides = array<i32>} : memref<128x128xf32, #tpu.memory_space<vmem>>, vector<128x128xf32>,
    %c0_28 = arith.constant 0 : index
    %c0_29 = arith.constant 0 : index
    %20 = vector.load %arg1[%c0_28, %c0_29] : memref<128x128xbf16, #tpu.memory_space<vmem>>, vector<128x128xbf16>
    %c0_30 = arith.constant 0 : index
    %c0_31 = arith.constant 0 : index
    %21 = vector.load %arg4[%c0_30, %c0_31] : memref<128x128xf32, #tpu.memory_space<vmem>>, vector<128x128xf32>
    %22 = arith.truncf %21 : vector<128x128xf32> to vector<128x128xbf16>
    %cst_32 = arith.constant dense<0.000000e+00> : vector<128x128xf32>
    %23 = tpu.matmul %20, %22, %cst_32 {dimension_numbers = #tpu.dot_dimension_numbers<[1], [0], [0], [1], [0, 0, 1, 1], [], []>} : vector<128x128xbf16>, vector<128x128xbf16>, vector<128x128xf32> -> vector<128x128xf32>
    %c0_33 = arith.constant 0 : index
    %c0_34 = arith.constant 0 : index
    %24 = vector.load %arg4[%c0_33, %c0_34] : memref<128x128xf32, #tpu.memory_space<vmem>>, vector<128x128xf32>
    tpu.vector_store %arg4[%c0_33, %c0_34], %23 {strides = array<i32>} : memref<128x128xf32, #tpu.memory_space<vmem>>, vector<128x128xf32>,
    %c0_35 = arith.constant 0 : index
    %c0_36 = arith.constant 0 : index
    %25 = vector.load %arg3[%c0_35, %c0_36] : memref<128x128xf32, #tpu.memory_space<vmem>>, vector<128x128xf32>
    %26 = arith.addf %25, %23 : vector<128x128xf32>
    %c0_37 = arith.constant 0 : index
    %c0_38 = arith.constant 0 : index
    %27 = vector.load %arg3[%c0_37, %c0_38] : memref<128x128xf32, #tpu.memory_space<vmem>>, vector<128x128xf32>
    tpu.vector_store %arg3[%c0_37, %c0_38], %26 {strides = array<i32>} : memref<128x128xf32, #tpu.memory_space<vmem>>, vector<128x128xf32>,
    %c0_39 = arith.constant 0 : index
    %c0_40 = arith.constant 0 : index
    %28 = vector.load %arg3[%c0_39, %c0_40] : memref<128x128xf32, #tpu.memory_space<vmem>>, vector<128x128xf32>
    %cst_41 = arith.constant 2.500000e-01 : f32
    %29 = vector.broadcast %cst_41 : f32 to vector<128x128xf32>
    %30 = arith.mulf %28, %29 : vector<128x128xf32>
    %c0_42 = arith.constant 0 : index
    %c0_43 = arith.constant 0 : index
    %31 = vector.load %arg3[%c0_42, %c0_43] : memref<128x128xf32, #tpu.memory_space<vmem>>, vector<128x128xf32>
    tpu.vector_store %arg3[%c0_42, %c0_43], %30 {strides = array<i32>} : memref<128x128xf32, #tpu.memory_space<vmem>>, vector<128x128xf32>,
    return
  }
  func.func @transform_0(%arg0: i32) -> (i32, i32) {
    %c0_i32 = arith.constant 0 : i32
    %c0_i32_0 = arith.constant 0 : i32
    %c0_i32_1 = arith.constant 0 : i32
    return %c0_i32, %c0_i32_0 : i32, i32
  }
  func.func @transform_1(%arg0: i32) -> (i32, i32) {
    %c0_i32 = arith.constant 0 : i32
    %c0_i32_0 = arith.constant 0 : i32
    %c0_i32_1 = arith.constant 0 : i32
    return %c0_i32, %c0_i32_0 : i32, i32
  }
  func.func @transform_2(%arg0: i32) -> (i32, i32) {
    %c0_i32 = arith.constant 0 : i32
    %c0_i32_0 = arith.constant 0 : i32
    %c0_i32_1 = arith.constant 0 : i32
    return %c0_i32, %c0_i32_0 : i32, i32
  }
}

</mosaic_0001>

<llo_original>
// kernel: _lightgcn_forward_impl.3
$region0: #{_lightgcn_forward_impl.3}
  #allocation0 [shape = 'u32[]', space=smem, size = 0x4, offset = 0x4, fixed_abs, tag = 'smem constant byte address 0x4 - core index']
  #allocation1 [shape = 'u32[144,128]{1,0:T(1,128)}', space=vmem, size = 0x12000, scoped, tag = 'internal scratch']
  %s0 = inlined_call_operand.vmem [shape: f32[8,128], index: 0, kind: input, shape index: {}]
  %s1 = inlined_call_operand.vmem [shape: f32[8,128], index: 1, kind: input, shape index: {}]
  %s2 = inlined_call_operand.vmem [shape: f32[8,128], index: 2, kind: input, shape index: {}]
  %s3 = inlined_call_operand.vmem [shape: f32[8,128], index: 3, kind: input, shape index: {}]
  %s4 = inlined_call_operand.vmem [shape: f32[8,128], index: 4, kind: input, shape index: {}]
  %s5 = inlined_call_operand.vmem [shape: f32[8,128], index: 5, kind: input, shape index: {}]
  %s6 = inlined_call_operand.hbm [shape: f32[1,1], index: 6, kind: output, shape index: {}]
  %s7 = sld [smem:[#allocation0]]
  $region38: #{_lightgcn_forward_impl.3} parent=0
    _
  %s9 = ssub.s32 1, %s7
  %s10 = scalar_select 0, %s9, %s7
  $region1: #{_lightgcn_forward_impl.3} parent=0
    #allocation2 [shape = 'u8[512]{0}', space=vmem, size = 0x400, scoped, tag = 'output window, operand 0, single buffered']
    #allocation3 [shape = 's32[1]{0}', space=sflag, size = 0x4, scoped, tag = 'scoped memory for _lightgcn_forward_impl.3']
    %11 = vsyncpa [#allocation3], 0
    // Predicated region
    $region2: #{_lightgcn_forward_impl.3} parent=1 // pred_check
      _
    $region3: #{_lightgcn_forward_impl.3} parent=1 // pred_check_branch
      %13 = sbr.rel (0) target = $region5
    $region4: #{_lightgcn_forward_impl.3} parent=1 // pred_region
      _
    $region5: #{_lightgcn_forward_impl.3} parent=1 // pred_fallthru
      _
    // Predicated region
    $region6: #{_lightgcn_forward_impl.3} parent=1 // pred_check
      _
    $region7: #{_lightgcn_forward_impl.3} parent=1 // pred_check_branch
      %15 = sbr.rel (0) target = $region9
    $region8: #{_lightgcn_forward_impl.3} parent=1 // pred_region
      _
    $region9: #{_lightgcn_forward_impl.3} parent=1 // pred_fallthru
      _
    // Predicated region
    $region10: #{_lightgcn_forward_impl.3} parent=1 // pred_check
      _
    $region11: #{_lightgcn_forward_impl.3} parent=1 // pred_check_branch
      %17 = sbr.rel (0) target = $region13
    $region12: #{_lightgcn_forward_impl.3} parent=1 // pred_region
      _
    $region13: #{_lightgcn_forward_impl.3} parent=1 // pred_fallthru
      _
    // Predicated region
    $region14: #{_lightgcn_forward_impl.3} parent=1 // pred_check
      _
    $region15: #{_lightgcn_forward_impl.3} parent=1 // pred_check_branch
      %19 = sbr.rel (0) target = $region17
    $region16: #{_lightgcn_forward_impl.3} parent=1 // pred_region
      _
    $region17: #{_lightgcn_forward_impl.3} parent=1 // pred_fallthru
      _
    // Predicated region
    $region18: #{_lightgcn_forward_impl.3} parent=1 // pred_check
      _
    $region19: #{_lightgcn_forward_impl.3} parent=1 // pred_check_branch
      %21 = sbr.rel (0) target = $region21
    $region20: #{_lightgcn_forward_impl.3} parent=1 // pred_region
      _
    $region21: #{_lightgcn_forward_impl.3} parent=1 // pred_fallthru
      _
    // Predicated region
    $region22: #{_lightgcn_forward_impl.3} parent=1 // pred_check
      _
    $region23: #{_lightgcn_forward_impl.3} parent=1 // pred_check_branch
      %23 = sbr.rel (0) target = $region25
    $region24: #{_lightgcn_forward_impl.3} parent=1 // pred_region
      _
    $region25: #{_lightgcn_forward_impl.3} parent=1 // pred_fallthru
      _
    %p24 = scmp.eq.s32.totalorder 0, 0
    // Predicated region
    $region26: #{_lightgcn_forward_impl.3} parent=1 // pred_check
      %p25 = pneg %p24
    $region27: #{_lightgcn_forward_impl.3} parent=1 // pred_check_branch
      %27 = sbr.rel (%p25) target = $region29
    $region28: #{_lightgcn_forward_impl.3} parent=1 // pred_region
      %vm28 = vcmask 0
      %29 = vst.msk [vmem:[#allocation2] sm:$0x1] %vm28, 0.0
    $region29: #{_lightgcn_forward_impl.3} parent=1 // pred_fallthru
      _
    %s30 = smul.u32 0, 8
    %v31 = vlaneseq
    %v32 = vshrl.u32 %v31, 7
    %v33 = vstv %s30
    %v34 = vadd.s32 %v33, %v32
    %vm35 = vcmp.lt.s32.totalorder %v34, 8
    %v36 = vsel %vm35, 1, 0
    %v37 = vcvt.s32.f32 %v36
    %v38 = vld [vmem:[%s0] sm:$0xff]
    %v39 = vld [vmem:[%s2] sm:$0xff]
    %v40 = vmul.f32 %v38, %v39
    %41 = vadd.xlane.f32.xlu0 %v40
    %v42 = vpop.xlane.xlu0 %41
    %v43 = vld [vmem:[%s1] sm:$0xff]
    %v44 = vmul.f32 %v38, %v43
    %45 = vadd.xlane.f32.xlu0 %v44
    %v46 = vpop.xlane.xlu0 %45
    %v47 = vsub.f32 %v42, %v46
    %v48 = vmax.f32 %v47, 0.0
    %v49 = vand.u32 2147483647, %v47
    %v50 = vsub.f32 0.0, %v49
    %v51 = vmul.f32 %v50, 1.442695
    %v52 = vpow.pop %v51
    %v53 = vadd.f32 %v52, 1.0
    %v54 = vlog2.pop %v53
    %v55 = vmul.f32 %v54, 0.6931472
    %v56 = vmul.f32 -0.5, %v52
    %v57 = vadd.f32 %v56, 1.0
    %v58 = vmul.f32 %v57, %v52
    %v59 = vand.u32 2147483647, %v52
    %vm60 = vcmp.lt.f32.partialorder %v59, 0.0004427343
    %v61 = vsel %vm60, %v58, %v55
    %v62 = vadd.f32 %v48, %v61
    %v63 = vld [vmem:[%s3] sm:$0xff]
    %v64 = vmul.f32 %v63, %v63
    %v65 = vmul.f32 %v37, %v64
    %66 = vadd.xlane.f32.xlu0 %v65
    %v67 = vpop.xlane.xlu0 %66
    %v68 = vrot.slane %v67, 4
    %v69 = vadd.f32 %v67, %v68
    %v70 = vrot.slane %v69, 2
    %v71 = vadd.f32 %v69, %v70
    %v72 = vrot.slane %v71, 1
    %v73 = vadd.f32 %v71, %v72
    %s74 = vtos %v73
    %v75 = vld [vmem:[%s4] sm:$0xff]
    %v76 = vmul.f32 %v75, %v75
    %v77 = vmul.f32 %v37, %v76
    %78 = vadd.xlane.f32.xlu0 %v77
    %v79 = vpop.xlane.xlu0 %78
    %v80 = vrot.slane %v79, 4
    %v81 = vadd.f32 %v79, %v80
    %v82 = vrot.slane %v81, 2
    %v83 = vadd.f32 %v81, %v82
    %v84 = vrot.slane %v83, 1
    %v85 = vadd.f32 %v83, %v84
    %s86 = vtos %v85
    %s87 = sadd.f32 %s74, %s86
    %v88 = vld [vmem:[%s5] sm:$0xff]
    %v89 = vmul.f32 %v88, %v88
    %v90 = vmul.f32 %v37, %v89
    %91 = vadd.xlane.f32.xlu0 %v90
    %v92 = vpop.xlane.xlu0 %91
    %v93 = vrot.slane %v92, 4
    %v94 = vadd.f32 %v92, %v93
    %v95 = vrot.slane %v94, 2
    %v96 = vadd.f32 %v94, %v95
    %v97 = vrot.slane %v96, 1
    %v98 = vadd.f32 %v96, %v97
    %s99 = vtos %v98
    %s100 = sadd.f32 %s87, %s99
    %s101 = smul.f32 %s100, 0.5
    %v102 = vmul.f32 %v37, %v62
    %vm103 = vcmask 7168
    %v104 = vsel %vm103, %v102, 0.0
    %105 = vadd.xlane.f32.xlu0 %v104
    %v106 = vpop.xlane.xlu0 %105
    %v107 = vrot.slane %v106, 4
    %v108 = vadd.f32 %v106, %v107
    %v109 = vrot.slane %v108, 2
    %v110 = vadd.f32 %v108, %v109
    %v111 = vrot.slane %v110, 1
    %v112 = vadd.f32 %v110, %v111
    %s113 = vtos %v112
    %s114 = smul.f32 %s101, 0.0001
    %s115 = sadd.f32 %s113, %s114
    %s116 = smul.f32 %s115, 0.125
    %v117 = vld [vmem:[#allocation2] sm:$0x1]
    %v118 = vstv %s116
    %v119 = vadd.f32 %v117, %v118
    %vm120 = vcmask 0
    %121 = vst.msk [vmem:[#allocation2] sm:$0x1] %vm120, %v119
    // Predicated region
    $region30: #{_lightgcn_forward_impl.3} parent=1 // pred_check
      _
    $region31: #{_lightgcn_forward_impl.3} parent=1 // pred_check_branch
      %123 = sbr.rel (0) target = $region33
    $region32: #{_lightgcn_forward_impl.3} parent=1 // pred_region
      %s125 = ssub.s32 16, 16
      %126 = vsyncadd [#allocation3], %s125
      %s128 = sshll.u32 [#allocation2], 4
      %s129 = int_to_ptr.vmem [resolvable:$true] %s128
      %131 = dma.vmem_to_hbm [thread:$0]  %s129, 16, %s6, [#allocation3]
    $region33: #{_lightgcn_forward_impl.3} parent=1 // pred_fallthru
      _
    // Predicated region
    $region34: #{_lightgcn_forward_impl.3} parent=1 // pred_check
      _
    $region35: #{_lightgcn_forward_impl.3} parent=1 // pred_check_branch
      %133 = sbr.rel (0) target = $region37
    $region36: #{_lightgcn_forward_impl.3} parent=1 // pred_region
      %134 = dma.done [#allocation3], 16
    $region37: #{_lightgcn_forward_impl.3} parent=1 // pred_fallthru
      _
    %135 = vsyncpa [#allocation3], 1

// kernel: _lightgcn_forward_impl.2
$region0: #{_lightgcn_forward_impl.2}
  #allocation0 [shape = 'u32[]', space=smem, size = 0x4, offset = 0x4, fixed_abs, tag = 'smem constant byte address 0x4 - core index']
  #allocation1 [shape = 'u32[144,128]{1,0:T(1,128)}', space=vmem, size = 0x12000, scoped, tag = 'internal scratch']
  #allocation2 [shape = 'f32[128,128]{1,0:T(8,128)}', space=vmem, size = 0x10000, scoped, tag = 'scratch operand']
  %s0 = inlined_call_operand.vmem [shape: bf16[128,128], index: 0, kind: input, shape index: {}]
  %s1 = inlined_call_operand.vmem [shape: f32[128,128], index: 1, kind: input, shape index: {}]
  %s2 = inlined_call_operand.vmem [shape: f32[128,128], index: 2, kind: output, shape index: {}]
  %s3 = sld [smem:[#allocation0]]
  $region18: #{_lightgcn_forward_impl.2} parent=0
    _
  %s5 = ssub.s32 1, %s3
  %s6 = scalar_select 0, %s5, %s3
  // Predicated region
  $region2: #{_lightgcn_forward_impl.2} parent=0 // pred_check
    _
  $region3: #{_lightgcn_forward_impl.2} parent=0 // pred_check_branch
    %8 = sbr.rel (0) target = $region5
  $region4: #{_lightgcn_forward_impl.2} parent=0 // pred_region
    _
  $region5: #{_lightgcn_forward_impl.2} parent=0 // pred_fallthru
    _
  // Predicated region
  $region6: #{_lightgcn_forward_impl.2} parent=0 // pred_check
    _
  $region7: #{_lightgcn_forward_impl.2} parent=0 // pred_check_branch
    %10 = sbr.rel (0) target = $region9
  $region8: #{_lightgcn_forward_impl.2} parent=0 // pred_region
    _
  $region9: #{_lightgcn_forward_impl.2} parent=0 // pred_fallthru
    _
  %v12 = vld [vmem:[%s1] sm:$0xff]
  %v13 = vld [vmem:[%s1 + $0x8] sm:$0xff]
  %v14 = vld [vmem:[%s1 + $0x10] sm:$0xff]
  %v15 = vld [vmem:[%s1 + $0x18] sm:$0xff]
  %v16 = vld [vmem:[%s1 + $0x20] sm:$0xff]
  %v17 = vld [vmem:[%s1 + $0x28] sm:$0xff]
  %v18 = vld [vmem:[%s1 + $0x30] sm:$0xff]
  %v19 = vld [vmem:[%s1 + $0x38] sm:$0xff]
  %v20 = vld [vmem:[%s1 + $0x40] sm:$0xff]
  %v21 = vld [vmem:[%s1 + $0x48] sm:$0xff]
  %v22 = vld [vmem:[%s1 + $0x50] sm:$0xff]
  %v23 = vld [vmem:[%s1 + $0x58] sm:$0xff]
  %v24 = vld [vmem:[%s1 + $0x60] sm:$0xff]
  %v25 = vld [vmem:[%s1 + $0x68] sm:$0xff]
  %v26 = vld [vmem:[%s1 + $0x70] sm:$0xff]
  %v27 = vld [vmem:[%s1 + $0x78] sm:$0xff]
  %28 = vst [vmem:[#allocation2] sm:$0xff] %v12
  %29 = vst [vmem:[#allocation2 + $0x8] sm:$0xff] %v13
  %30 = vst [vmem:[#allocation2 + $0x10] sm:$0xff] %v14
  %31 = vst [vmem:[#allocation2 + $0x18] sm:$0xff] %v15
  %32 = vst [vmem:[#allocation2 + $0x20] sm:$0xff] %v16
  %33 = vst [vmem:[#allocation2 + $0x28] sm:$0xff] %v17
  %34 = vst [vmem:[#allocation2 + $0x30] sm:$0xff] %v18
  %35 = vst [vmem:[#allocation2 + $0x38] sm:$0xff] %v19
  %36 = vst [vmem:[#allocation2 + $0x40] sm:$0xff] %v20
  %37 = vst [vmem:[#allocation2 + $0x48] sm:$0xff] %v21
  %38 = vst [vmem:[#allocation2 + $0x50] sm:$0xff] %v22
  %39 = vst [vmem:[#allocation2 + $0x58] sm:$0xff] %v23
  %40 = vst [vmem:[#allocation2 + $0x60] sm:$0xff] %v24
  %41 = vst [vmem:[#allocation2 + $0x68] sm:$0xff] %v25
  %42 = vst [vmem:[#allocation2 + $0x70] sm:$0xff] %v26
  %43 = vst [vmem:[#allocation2 + $0x78] sm:$0xff] %v27
  %v44 = vld [vmem:[%s1] sm:$0xff]
  %v45 = vld [vmem:[%s1 + $0x8] sm:$0xff]
  %v46 = vld [vmem:[%s1 + $0x10] sm:$0xff]
  %v47 = vld [vmem:[%s1 + $0x18] sm:$0xff]
  %v48 = vld [vmem:[%s1 + $0x20] sm:$0xff]
  %v49 = vld [vmem:[%s1 + $0x28] sm:$0xff]
  %v50 = vld [vmem:[%s1 + $0x30] sm:$0xff]
  %v51 = vld [vmem:[%s1 + $0x38] sm:$0xff]
  %v52 = vld [vmem:[%s1 + $0x40] sm:$0xff]
  %v53 = vld [vmem:[%s1 + $0x48] sm:$0xff]
  %v54 = vld [vmem:[%s1 + $0x50] sm:$0xff]
  %v55 = vld [vmem:[%s1 + $0x58] sm:$0xff]
  %v56 = vld [vmem:[%s1 + $0x60] sm:$0xff]
  %v57 = vld [vmem:[%s1 + $0x68] sm:$0xff]
  %v58 = vld [vmem:[%s1 + $0x70] sm:$0xff]
  %v59 = vld [vmem:[%s1 + $0x78] sm:$0xff]
  %60 = vst [vmem:[%s2] sm:$0xff] %v44
  %61 = vst [vmem:[%s2 + $0x8] sm:$0xff] %v45
  %62 = vst [vmem:[%s2 + $0x10] sm:$0xff] %v46
  %63 = vst [vmem:[%s2 + $0x18] sm:$0xff] %v47
  %64 = vst [vmem:[%s2 + $0x20] sm:$0xff] %v48
  %65 = vst [vmem:[%s2 + $0x28] sm:$0xff] %v49
  %66 = vst [vmem:[%s2 + $0x30] sm:$0xff] %v50
  %67 = vst [vmem:[%s2 + $0x38] sm:$0xff] %v51
  %68 = vst [vmem:[%s2 + $0x40] sm:$0xff] %v52
  %69 = vst [vmem:[%s2 + $0x48] sm:$0xff] %v53
  %70 = vst [vmem:[%s2 + $0x50] sm:$0xff] %v54
  %71 = vst [vmem:[%s2 + $0x58] sm:$0xff] %v55
  %72 = vst [vmem:[%s2 + $0x60] sm:$0xff] %v56
  %73 = vst [vmem:[%s2 + $0x68] sm:$0xff] %v57
  %74 = vst [vmem:[%s2 + $0x70] sm:$0xff] %v58
  %75 = vst [vmem:[%s2 + $0x78] sm:$0xff] %v59
  %v76 = vld [vmem:[%s0] sm:$0xf]
  %v77 = vld [vmem:[%s0 + $0x4] sm:$0xf]
  %v78 = vld [vmem:[%s0 + $0x8] sm:$0xf]
  %v79 = vld [vmem:[%s0 + $0xc] sm:$0xf]
  %v80 = vld [vmem:[%s0 + $0x10] sm:$0xf]
  %v81 = vld [vmem:[%s0 + $0x14] sm:$0xf]
  %v82 = vld [vmem:[%s0 + $0x18] sm:$0xf]
  %v83 = vld [vmem:[%s0 + $0x1c] sm:$0xf]
  %v84 = vld [vmem:[%s0 + $0x20] sm:$0xf]
  %v85 = vld [vmem:[%s0 + $0x24] sm:$0xf]
  %v86 = vld [vmem:[%s0 + $0x28] sm:$0xf]
  %v87 = vld [vmem:[%s0 + $0x2c] sm:$0xf]
  %v88 = vld [vmem:[%s0 + $0x30] sm:$0xf]
  %v89 = vld [vmem:[%s0 + $0x34] sm:$0xf]
  %v90 = vld [vmem:[%s0 + $0x38] sm:$0xf]
  %v91 = vld [vmem:[%s0 + $0x3c] sm:$0xf]
  %v92 = vld [vmem:[#allocation2] sm:$0xff]
  %v93 = vld [vmem:[#allocation2 + $0x8] sm:$0xff]
  %v94 = vld [vmem:[#allocation2 + $0x10] sm:$0xff]
  %v95 = vld [vmem:[#allocation2 + $0x18] sm:$0xff]
  %v96 = vld [vmem:[#allocation2 + $0x20] sm:$0xff]
  %v97 = vld [vmem:[#allocation2 + $0x28] sm:$0xff]
  %v98 = vld [vmem:[#allocation2 + $0x30] sm:$0xff]
  %v99 = vld [vmem:[#allocation2 + $0x38] sm:$0xff]
  %v100 = vld [vmem:[#allocation2 + $0x40] sm:$0xff]
  %v101 = vld [vmem:[#allocation2 + $0x48] sm:$0xff]
  %v102 = vld [vmem:[#allocation2 + $0x50] sm:$0xff]
  %v103 = vld [vmem:[#allocation2 + $0x58] sm:$0xff]
  %v104 = vld [vmem:[#allocation2 + $0x60] sm:$0xff]
  %v105 = vld [vmem:[#allocation2 + $0x68] sm:$0xff]
  %v106 = vld [vmem:[#allocation2 + $0x70] sm:$0xff]
  %v107 = vld [vmem:[#allocation2 + $0x78] sm:$0xff]
  %v108 = vpack.c.bf16 %v93, %v92
  %v109 = vpack.c.bf16 %v95, %v94
  %v110 = vpack.c.bf16 %v97, %v96
  %v111 = vpack.c.bf16 %v99, %v98
  %v112 = vpack.c.bf16 %v101, %v100
  %v113 = vpack.c.bf16 %v103, %v102
  %v114 = vpack.c.bf16 %v105, %v104
  %v115 = vpack.c.bf16 %v107, %v106
  %v132 = vunpack.c.l.b16 %v76
  %v133 = vunpack.c.l.b16 %v77
  %v134 = vunpack.c.l.b16 %v78
  %v135 = vunpack.c.l.b16 %v79
  %v136 = vunpack.c.l.b16 %v80
  %v137 = vunpack.c.l.b16 %v81
  %v138 = vunpack.c.l.b16 %v82
  %v139 = vunpack.c.l.b16 %v83
  %v140 = vunpack.c.l.b16 %v84
  %v141 = vunpack.c.l.b16 %v85
  %v142 = vunpack.c.l.b16 %v86
  %v143 = vunpack.c.l.b16 %v87
  %v144 = vunpack.c.l.b16 %v88
  %v145 = vunpack.c.l.b16 %v89
  %v146 = vunpack.c.l.b16 %v90
  %v147 = vunpack.c.l.b16 %v91
  %v148 = vpack.c.b16 %v133, %v132
  %v149 = vpack.c.b16 %v135, %v134
  %v150 = vpack.c.b16 %v137, %v136
  %v151 = vpack.c.b16 %v139, %v138
  %v152 = vpack.c.b16 %v141, %v140
  %v153 = vpack.c.b16 %v143, %v142
  %v154 = vpack.c.b16 %v145, %v144
  %v155 = vpack.c.b16 %v147, %v146
  %164 = vmatprep.subr.bf16.mxu0 0
  %165 = vmatpush1.bf16.msra.mxu0 %v108
  %166 = vmatprep.subr.bf16.mxu0 0
  %167 = vmatpush1.bf16.msra.mxu0 %v109
  %168 = vmatprep.subr.bf16.mxu0 0
  %169 = vmatpush1.bf16.msra.mxu0 %v110
  %170 = vmatprep.subr.bf16.mxu0 0
  %171 = vmatpush1.bf16.msra.mxu0 %v111
  %172 = vmatprep.subr.bf16.mxu0 0
  %173 = vmatpush1.bf16.msra.mxu0 %v112
  %174 = vmatprep.subr.bf16.mxu0 0
  %175 = vmatpush1.bf16.msra.mxu0 %v113
  %176 = vmatprep.subr.bf16.mxu0 0
  %177 = vmatpush1.bf16.msra.mxu0 %v114
  %178 = vmatprep.subr.bf16.mxu0 0
  %179 = vmatpush1.bf16.msra.mxu0 %v115
  %180 = vmatprep.subr.bf16.mxu0 0
  %181 = vmatpush1.bf16.msra.mxu0 0
  %182 = vmatprep.subr.bf16.mxu0 0
  %183 = vmatpush1.bf16.msra.mxu0 0
  %184 = vmatprep.subr.bf16.mxu0 0
  %185 = vmatpush1.bf16.msra.mxu0 0
  %186 = vmatprep.subr.bf16.mxu0 0
  %187 = vmatpush1.bf16.msra.mxu0 0
  %188 = vmatprep.subr.bf16.mxu0 0
  %189 = vmatpush1.bf16.msra.mxu0 0
  %190 = vmatprep.subr.bf16.mxu0 0
  %191 = vmatpush1.bf16.msra.mxu0 0
  %192 = vmatprep.subr.bf16.mxu0 0
  %193 = vmatpush1.bf16.msra.mxu0 0
  %194 = vmatprep.subr.bf16.mxu0 0
  %195 = vmatpush1.bf16.msra.mxu0 0
  %196 = vmatprep.mubr.bf16.mxu0 0
  %197 = vmatmul.mubr.bf16.gmra.mrb[0].mxu0 %v148
  %v198 = vpop.f32.mrb[0].mxu0
  %v199 = vadd.f32 0.0, %v198
  %v200 = vpop.f32.mrb[0].mxu0
  %v201 = vpop.f32.mrb[0].mxu0
  %v202 = vadd.f32 0.0, %v201
  %v203 = vpop.f32.mrb[0].mxu0
  %204 = vmatprep.mubr.bf16.mxu0 0
  %205 = vmatmul.mubr.bf16.gmra.mrb[0].mxu0 %v149
  %v206 = vpop.f32.mrb[0].mxu0
  %v207 = vadd.f32 0.0, %v206
  %v208 = vpop.f32.mrb[0].mxu0
  %v209 = vpop.f32.mrb[0].mxu0
  %v210 = vadd.f32 0.0, %v209
  %v211 = vpop.f32.mrb[0].mxu0
  %212 = vmatprep.mubr.bf16.mxu0 0
  %213 = vmatmul.mubr.bf16.gmra.mrb[0].mxu0 %v150
  %v214 = vpop.f32.mrb[0].mxu0
  %v215 = vadd.f32 0.0, %v214
  %v216 = vpop.f32.mrb[0].mxu0
  %v217 = vpop.f32.mrb[0].mxu0
  %v218 = vadd.f32 0.0, %v217
  %v219 = vpop.f32.mrb[0].mxu0
  %220 = vmatprep.mubr.bf16.mxu0 0
  %221 = vmatmul.mubr.bf16.gmra.mrb[0].mxu0 %v151
  %v222 = vpop.f32.mrb[0].mxu0
  %v223 = vadd.f32 0.0, %v222
  %v224 = vpop.f32.mrb[0].mxu0
  %v225 = vpop.f32.mrb[0].mxu0
  %v226 = vadd.f32 0.0, %v225
  %v227 = vpop.f32.mrb[0].mxu0
  %228 = vmatprep.mubr.bf16.mxu0 0
  %229 = vmatmul.mubr.bf16.gmra.mrb[0].mxu0 %v152
  %v230 = vpop.f32.mrb[0].mxu0
  %v231 = vadd.f32 0.0, %v230
  %v232 = vpop.f32.mrb[0].mxu0
  %v233 = vpop.f32.mrb[0].mxu0
  %v234 = vadd.f32 0.0, %v233
  %v235 = vpop.f32.mrb[0].mxu0
  %236 = vmatprep.mubr.bf16.mxu0 0
  %237 = vmatmul.mubr.bf16.gmra.mrb[0].mxu0 %v153
  %v238 = vpop.f32.mrb[0].mxu0
  %v239 = vadd.f32 0.0, %v238
  %v240 = vpop.f32.mrb[0].mxu0
  %v241 = vpop.f32.mrb[0].mxu0
  %v242 = vadd.f32 0.0, %v241
  %v243 = vpop.f32.mrb[0].mxu0
  %244 = vmatprep.mubr.bf16.mxu0 0
  %245 = vmatmul.mubr.bf16.gmra.mrb[0].mxu0 %v154
  %v246 = vpop.f32.mrb[0].mxu0
  %v247 = vadd.f32 0.0, %v246
  %v248 = vpop.f32.mrb[0].mxu0
  %v249 = vpop.f32.mrb[0].mxu0
  %v250 = vadd.f32 0.0, %v249
  %v251 = vpop.f32.mrb[0].mxu0
  %252 = vmatprep.mubr.bf16.mxu0 0
  %253 = vmatmul.mubr.bf16.gmra.mrb[0].mxu0 %v155
  %v254 = vpop.f32.mrb[0].mxu0
  %v255 = vadd.f32 0.0, %v254
  %v256 = vpop.f32.mrb[0].mxu0
  %v257 = vpop.f32.mrb[0].mxu0
  %v258 = vadd.f32 0.0, %v257
  %v259 = vpop.f32.mrb[0].mxu0
  %260 = vdwg.mxu0
  %261 = vst [vmem:[#allocation2] sm:$0xff] %v199
  %262 = vst [vmem:[#allocation2 + $0x8] sm:$0xff] %v202
  %263 = vst [vmem:[#allocation2 + $0x10] sm:$0xff] %v207
  %264 = vst [vmem:[#allocation2 + $0x18] sm:$0xff] %v210
  %265 = vst [vmem:[#allocation2 + $0x20] sm:$0xff] %v215
  %266 = vst [vmem:[#allocation2 + $0x28] sm:$0xff] %v218
  %267 = vst [vmem:[#allocation2 + $0x30] sm:$0xff] %v223
  %268 = vst [vmem:[#allocation2 + $0x38] sm:$0xff] %v226
  %269 = vst [vmem:[#allocation2 + $0x40] sm:$0xff] %v231
  %270 = vst [vmem:[#allocation2 + $0x48] sm:$0xff] %v234
  %271 = vst [vmem:[#allocation2 + $0x50] sm:$0xff] %v239
  %272 = vst [vmem:[#allocation2 + $0x58] sm:$0xff] %v242
  %273 = vst [vmem:[#allocation2 + $0x60] sm:$0xff] %v247
  %274 = vst [vmem:[#allocation2 + $0x68] sm:$0xff] %v250
  %275 = vst [vmem:[#allocation2 + $0x70] sm:$0xff] %v255
  %276 = vst [vmem:[#allocation2 + $0x78] sm:$0xff] %v258
  %v277 = vld [vmem:[%s2] sm:$0xff]
  %v278 = vld [vmem:[%s2 + $0x8] sm:$0xff]
  %v279 = vld [vmem:[%s2 + $0x10] sm:$0xff]
  %v280 = vld [vmem:[%s2 + $0x18] sm:$0xff]
  %v281 = vld [vmem:[%s2 + $0x20] sm:$0xff]
  %v282 = vld [vmem:[%s2 + $0x28] sm:$0xff]
  %v283 = vld [vmem:[%s2 + $0x30] sm:$0xff]
  %v284 = vld [vmem:[%s2 + $0x38] sm:$0xff]
  %v285 = vld [vmem:[%s2 + $0x40] sm:$0xff]
  %v286 = vld [vmem:[%s2 + $0x48] sm:$0xff]
  %v287 = vld [vmem:[%s2 + $0x50] sm:$0xff]
  %v288 = vld [vmem:[%s2 + $0x58] sm:$0xff]
  %v289 = vld [vmem:[%s2 + $0x60] sm:$0xff]
  %v290 = vld [vmem:[%s2 + $0x68] sm:$0xff]
  %v291 = vld [vmem:[%s2 + $0x70] sm:$0xff]
  %v292 = vld [vmem:[%s2 + $0x78] sm:$0xff]
  %v293 = vadd.f32 %v277, %v199
  %v294 = vadd.f32 %v278, %v202
  %v295 = vadd.f32 %v279, %v207
  %v296 = vadd.f32 %v280, %v210
  %v297 = vadd.f32 %v281, %v215
  %v298 = vadd.f32 %v282, %v218
  %v299 = vadd.f32 %v283, %v223
  %v300 = vadd.f32 %v284, %v226
  %v301 = vadd.f32 %v285, %v231
  %v302 = vadd.f32 %v286, %v234
  %v303 = vadd.f32 %v287, %v239
  %v304 = vadd.f32 %v288, %v242
  %v305 = vadd.f32 %v289, %v247
  %v306 = vadd.f32 %v290, %v250
  %v307 = vadd.f32 %v291, %v255
  %v308 = vadd.f32 %v292, %v258
  %309 = vst [vmem:[%s2] sm:$0xff] %v293
  %310 = vst [vmem:[%s2 + $0x8] sm:$0xff] %v294
  %311 = vst [vmem:[%s2 + $0x10] sm:$0xff] %v295
  %312 = vst [vmem:[%s2 + $0x18] sm:$0xff] %v296
  %313 = vst [vmem:[%s2 + $0x20] sm:$0xff] %v297
  %314 = vst [vmem:[%s2 + $0x28] sm:$0xff] %v298
  %315 = vst [vmem:[%s2 + $0x30] sm:$0xff] %v299
  %316 = vst [vmem:[%s2 + $0x38] sm:$0xff] %v300
  %317 = vst [vmem:[%s2 + $0x40] sm:$0xff] %v301
  %318 = vst [vmem:[%s2 + $0x48] sm:$0xff] %v302
  %319 = vst [vmem:[%s2 + $0x50] sm:$0xff] %v303
  %320 = vst [vmem:[%s2 + $0x58] sm:$0xff] %v304
  %321 = vst [vmem:[%s2 + $0x60] sm:$0xff] %v305
  %322 = vst [vmem:[%s2 + $0x68] sm:$0xff] %v306
  %323 = vst [vmem:[%s2 + $0x70] sm:$0xff] %v307
  %324 = vst [vmem:[%s2 + $0x78] sm:$0xff] %v308
  %v325 = vld [vmem:[%s0] sm:$0xf]
  %v326 = vld [vmem:[%s0 + $0x4] sm:$0xf]
  %v327 = vld [vmem:[%s0 + $0x8] sm:$0xf]
  %v328 = vld [vmem:[%s0 + $0xc] sm:$0xf]
  %v329 = vld [vmem:[%s0 + $0x10] sm:$0xf]
  %v330 = vld [vmem:[%s0 + $0x14] sm:$0xf]
  %v331 = vld [vmem:[%s0 + $0x18] sm:$0xf]
  %v332 = vld [vmem:[%s0 + $0x1c] sm:$0xf]
  %v333 = vld [vmem:[%s0 + $0x20] sm:$0xf]
  %v334 = vld [vmem:[%s0 + $0x24] sm:$0xf]
  %v335 = vld [vmem:[%s0 + $0x28] sm:$0xf]
  %v336 = vld [vmem:[%s0 + $0x2c] sm:$0xf]
  %v337 = vld [vmem:[%s0 + $0x30] sm:$0xf]
  %v338 = vld [vmem:[%s0 + $0x34] sm:$0xf]
  %v339 = vld [vmem:[%s0 + $0x38] sm:$0xf]
  %v340 = vld [vmem:[%s0 + $0x3c] sm:$0xf]
  %v341 = vld [vmem:[#allocation2] sm:$0xff]
  %v342 = vld [vmem:[#allocation2 + $0x8] sm:$0xff]
  %v343 = vld [vmem:[#allocation2 + $0x10] sm:$0xff]
  %v344 = vld [vmem:[#allocation2 + $0x18] sm:$0xff]
  %v345 = vld [vmem:[#allocation2 + $0x20] sm:$0xff]
  %v346 = vld [vmem:[#allocation2 + $0x28] sm:$0xff]
  %v347 = vld [vmem:[#allocation2 + $0x30] sm:$0xff]
  %v348 = vld [vmem:[#allocation2 + $0x38] sm:$0xff]
  %v349 = vld [vmem:[#allocation2 + $0x40] sm:$0xff]
  %v350 = vld [vmem:[#allocation2 + $0x48] sm:$0xff]
  %v351 = vld [vmem:[#allocation2 + $0x50] sm:$0xff]
  %v352 = vld [vmem:[#allocation2 + $0x58] sm:$0xff]
  %v353 = vld [vmem:[#allocation2 + $0x60] sm:$0xff]
  %v354 = vld [vmem:[#allocation2 + $0x68] sm:$0xff]
  %v355 = vld [vmem:[#allocation2 + $0x70] sm:$0xff]
  %v356 = vld [vmem:[#allocation2 + $0x78] sm:$0xff]
  %v357 = vpack.c.bf16 %v342, %v341
  %v358 = vpack.c.bf16 %v344, %v343
  %v359 = vpack.c.bf16 %v346, %v345
  %v360 = vpack.c.bf16 %v348, %v347
  %v361 = vpack.c.bf16 %v350, %v349
  %v362 = vpack.c.bf16 %v352, %v351
  %v363 = vpack.c.bf16 %v354, %v353
  %v364 = vpack.c.bf16 %v356, %v355
  %v381 = vunpack.c.l.b16 %v325
  %v382 = vunpack.c.l.b16 %v326
  %v383 = vunpack.c.l.b16 %v327
  %v384 = vunpack.c.l.b16 %v328
  %v385 = vunpack.c.l.b16 %v329
  %v386 = vunpack.c.l.b16 %v330
  %v387 = vunpack.c.l.b16 %v331
  %v388 = vunpack.c.l.b16 %v332
  %v389 = vunpack.c.l.b16 %v333
  %v390 = vunpack.c.l.b16 %v334
  %v391 = vunpack.c.l.b16 %v335
  %v392 = vunpack.c.l.b16 %v336
  %v393 = vunpack.c.l.b16 %v337
  %v394 = vunpack.c.l.b16 %v338
  %v395 = vunpack.c.l.b16 %v339
  %v396 = vunpack.c.l.b16 %v340
  %v397 = vpack.c.b16 %v382, %v381
  %v398 = vpack.c.b16 %v384, %v383
  %v399 = vpack.c.b16 %v386, %v385
  %v400 = vpack.c.b16 %v388, %v387
  %v401 = vpack.c.b16 %v390, %v389
  %v402 = vpack.c.b16 %v392, %v391
  %v403 = vpack.c.b16 %v394, %v393
  %v404 = vpack.c.b16 %v396, %v395
  %413 = vmatprep.subr.bf16.mxu0 0
  %414 = vmatpush1.bf16.msra.mxu0 %v357
  %415 = vmatprep.subr.bf16.mxu0 0
  %416 = vmatpush1.bf16.msra.mxu0 %v358
  %417 = vmatprep.subr.bf16.mxu0 0
  %418 = vmatpush1.bf16.msra.mxu0 %v359
  %419 = vmatprep.subr.bf16.mxu0 0
  %420 = vmatpush1.bf16.msra.mxu0 %v360
  %421 = vmatprep.subr.bf16.mxu0 0
  %422 = vmatpush1.bf16.msra.mxu0 %v361
  %423 = vmatprep.subr.bf16.mxu0 0
  %424 = vmatpush1.bf16.msra.mxu0 %v362
  %425 = vmatprep.subr.bf16.mxu0 0
  %426 = vmatpush1.bf16.msra.mxu0 %v363
  %427 = vmatprep.subr.bf16.mxu0 0
  %428 = vmatpush1.bf16.msra.mxu0 %v364
  %429 = vmatprep.subr.bf16.mxu0 0
  %430 = vmatpush1.bf16.msra.mxu0 0
  %431 = vmatprep.subr.bf16.mxu0 0
  %432 = vmatpush1.bf16.msra.mxu0 0
  %433 = vmatprep.subr.bf16.mxu0 0
  %434 = vmatpush1.bf16.msra.mxu0 0
  %435 = vmatprep.subr.bf16.mxu0 0
  %436 = vmatpush1.bf16.msra.mxu0 0
  %437 = vmatprep.subr.bf16.mxu0 0
  %438 = vmatpush1.bf16.msra.mxu0 0
  %439 = vmatprep.subr.bf16.mxu0 0
  %440 = vmatpush1.bf16.msra.mxu0 0
  %441 = vmatprep.subr.bf16.mxu0 0
  %442 = vmatpush1.bf16.msra.mxu0 0
  %443 = vmatprep.subr.bf16.mxu0 0
  %444 = vmatpush1.bf16.msra.mxu0 0
  %445 = vmatprep.mubr.bf16.mxu0 0
  %446 = vmatmul.mubr.bf16.gmra.mrb[0].mxu0 %v397
  %v447 = vpop.f32.mrb[0].mxu0
  %v448 = vadd.f32 0.0, %v447
  %v449 = vpop.f32.mrb[0].mxu0
  %v450 = vpop.f32.mrb[0].mxu0
  %v451 = vadd.f32 0.0, %v450
  %v452 = vpop.f32.mrb[0].mxu0
  %453 = vmatprep.mubr.bf16.mxu0 0
  %454 = vmatmul.mubr.bf16.gmra.mrb[0].mxu0 %v398
  %v455 = vpop.f32.mrb[0].mxu0
  %v456 = vadd.f32 0.0, %v455
  %v457 = vpop.f32.mrb[0].mxu0
  %v458 = vpop.f32.mrb[0].mxu0
  %v459 = vadd.f32 0.0, %v458
  %v460 = vpop.f32.mrb[0].mxu0
  %461 = vmatprep.mubr.bf16.mxu0 0
  %462 = vmatmul.mubr.bf16.gmra.mrb[0].mxu0 %v399
  %v463 = vpop.f32.mrb[0].mxu0
  %v464 = vadd.f32 0.0, %v463
  %v465 = vpop.f32.mrb[0].mxu0
  %v466 = vpop.f32.mrb[0].mxu0
  %v467 = vadd.f32 0.0, %v466
  %v468 = vpop.f32.mrb[0].mxu0
  %469 = vmatprep.mubr.bf16.mxu0 0
  %470 = vmatmul.mubr.bf16.gmra.mrb[0].mxu0 %v400
  %v471 = vpop.f32.mrb[0].mxu0
  %v472 = vadd.f32 0.0, %v471
  %v473 = vpop.f32.mrb[0].mxu0
  %v474 = vpop.f32.mrb[0].mxu0
  %v475 = vadd.f32 0.0, %v474
  %v476 = vpop.f32.mrb[0].mxu0
  %477 = vmatprep.mubr.bf16.mxu0 0
  %478 = vmatmul.mubr.bf16.gmra.mrb[0].mxu0 %v401
  %v479 = vpop.f32.mrb[0].mxu0
  %v480 = vadd.f32 0.0, %v479
  %v481 = vpop.f32.mrb[0].mxu0
  %v482 = vpop.f32.mrb[0].mxu0
  %v483 = vadd.f32 0.0, %v482
  %v484 = vpop.f32.mrb[0].mxu0
  %485 = vmatprep.mubr.bf16.mxu0 0
  %486 = vmatmul.mubr.bf16.gmra.mrb[0].mxu0 %v402
  %v487 = vpop.f32.mrb[0].mxu0
  %v488 = vadd.f32 0.0, %v487
  %v489 = vpop.f32.mrb[0].mxu0
  %v490 = vpop.f32.mrb[0].mxu0
  %v491 = vadd.f32 0.0, %v490
  %v492 = vpop.f32.mrb[0].mxu0
  %493 = vmatprep.mubr.bf16.mxu0 0
  %494 = vmatmul.mubr.bf16.gmra.mrb[0].mxu0 %v403
  %v495 = vpop.f32.mrb[0].mxu0
  %v496 = vadd.f32 0.0, %v495
  %v497 = vpop.f32.mrb[0].mxu0
  %v498 = vpop.f32.mrb[0].mxu0
  %v499 = vadd.f32 0.0, %v498
  %v500 = vpop.f32.mrb[0].mxu0
  %501 = vmatprep.mubr.bf16.mxu0 0
  %502 = vmatmul.mubr.bf16.gmra.mrb[0].mxu0 %v404
  %v503 = vpop.f32.mrb[0].mxu0
  %v504 = vadd.f32 0.0, %v503
  %v505 = vpop.f32.mrb[0].mxu0
  %v506 = vpop.f32.mrb[0].mxu0
  %v507 = vadd.f32 0.0, %v506
  %v508 = vpop.f32.mrb[0].mxu0
  %509 = vdwg.mxu0
  %510 = vst [vmem:[#allocation2] sm:$0xff] %v448
  %511 = vst [vmem:[#allocation2 + $0x8] sm:$0xff] %v451
  %512 = vst [vmem:[#allocation2 + $0x10] sm:$0xff] %v456
  %513 = vst [vmem:[#allocation2 + $0x18] sm:$0xff] %v459
  %514 = vst [vmem:[#allocation2 + $0x20] sm:$0xff] %v464
  %515 = vst [vmem:[#allocation2 + $0x28] sm:$0xff] %v467
  %516 = vst [vmem:[#allocation2 + $0x30] sm:$0xff] %v472
  %517 = vst [vmem:[#allocation2 + $0x38] sm:$0xff] %v475
  %518 = vst [vmem:[#allocation2 + $0x40] sm:$0xff] %v480
  %519 = vst [vmem:[#allocation2 + $0x48] sm:$0xff] %v483
  %520 = vst [vmem:[#allocation2 + $0x50] sm:$0xff] %v488
  %521 = vst [vmem:[#allocation2 + $0x58] sm:$0xff] %v491
  %522 = vst [vmem:[#allocation2 + $0x60] sm:$0xff] %v496
  %523 = vst [vmem:[#allocation2 + $0x68] sm:$0xff] %v499
  %524 = vst [vmem:[#allocation2 + $0x70] sm:$0xff] %v504
  %525 = vst [vmem:[#allocation2 + $0x78] sm:$0xff] %v507
  %v526 = vld [vmem:[%s2] sm:$0xff]
  %v527 = vld [vmem:[%s2 + $0x8] sm:$0xff]
  %v528 = vld [vmem:[%s2 + $0x10] sm:$0xff]
  %v529 = vld [vmem:[%s2 + $0x18] sm:$0xff]
  %v530 = vld [vmem:[%s2 + $0x20] sm:$0xff]
  %v531 = vld [vmem:[%s2 + $0x28] sm:$0xff]
  %v532 = vld [vmem:[%s2 + $0x30] sm:$0xff]
  %v533 = vld [vmem:[%s2 + $0x38] sm:$0xff]
  %v534 = vld [vmem:[%s2 + $0x40] sm:$0xff]
  %v535 = vld [vmem:[%s2 + $0x48] sm:$0xff]
  %v536 = vld [vmem:[%s2 + $0x50] sm:$0xff]
  %v537 = vld [vmem:[%s2 + $0x58] sm:$0xff]
  %v538 = vld [vmem:[%s2 + $0x60] sm:$0xff]
  %v539 = vld [vmem:[%s2 + $0x68] sm:$0xff]
  %v540 = vld [vmem:[%s2 + $0x70] sm:$0xff]
  %v541 = vld [vmem:[%s2 + $0x78] sm:$0xff]
  %v542 = vadd.f32 %v526, %v448
  %v543 = vadd.f32 %v527, %v451
  %v544 = vadd.f32 %v528, %v456
  %v545 = vadd.f32 %v529, %v459
  %v546 = vadd.f32 %v530, %v464
  %v547 = vadd.f32 %v531, %v467
  %v548 = vadd.f32 %v532, %v472
  %v549 = vadd.f32 %v533, %v475
  %v550 = vadd.f32 %v534, %v480
  %v551 = vadd.f32 %v535, %v483
  %v552 = vadd.f32 %v536, %v488
  %v553 = vadd.f32 %v537, %v491
  %v554 = vadd.f32 %v538, %v496
  %v555 = vadd.f32 %v539, %v499
  %v556 = vadd.f32 %v540, %v504
  %v557 = vadd.f32 %v541, %v507
  %558 = vst [vmem:[%s2] sm:$0xff] %v542
  %559 = vst [vmem:[%s2 + $0x8] sm:$0xff] %v543
  %560 = vst [vmem:[%s2 + $0x10] sm:$0xff] %v544
  %561 = vst [vmem:[%s2 + $0x18] sm:$0xff] %v545
  %562 = vst [vmem:[%s2 + $0x20] sm:$0xff] %v546
  %563 = vst [vmem:[%s2 + $0x28] sm:$0xff] %v547
  %564 = vst [vmem:[%s2 + $0x30] sm:$0xff] %v548
  %565 = vst [vmem:[%s2 + $0x38] sm:$0xff] %v549
  %566 = vst [vmem:[%s2 + $0x40] sm:$0xff] %v550
  %567 = vst [vmem:[%s2 + $0x48] sm:$0xff] %v551
  %568 = vst [vmem:[%s2 + $0x50] sm:$0xff] %v552
  %569 = vst [vmem:[%s2 + $0x58] sm:$0xff] %v553
  %570 = vst [vmem:[%s2 + $0x60] sm:$0xff] %v554
  %571 = vst [vmem:[%s2 + $0x68] sm:$0xff] %v555
  %572 = vst [vmem:[%s2 + $0x70] sm:$0xff] %v556
  %573 = vst [vmem:[%s2 + $0x78] sm:$0xff] %v557
  %v574 = vld [vmem:[%s0] sm:$0xf]
  %v575 = vld [vmem:[%s0 + $0x4] sm:$0xf]
  %v576 = vld [vmem:[%s0 + $0x8] sm:$0xf]
  %v577 = vld [vmem:[%s0 + $0xc] sm:$0xf]
  %v578 = vld [vmem:[%s0 + $0x10] sm:$0xf]
  %v579 = vld [vmem:[%s0 + $0x14] sm:$0xf]
  %v580 = vld [vmem:[%s0 + $0x18] sm:$0xf]
  %v581 = vld [vmem:[%s0 + $0x1c] sm:$0xf]
  %v582 = vld [vmem:[%s0 + $0x20] sm:$0xf]
  %v583 = vld [vmem:[%s0 + $0x24] sm:$0xf]
  %v584 = vld [vmem:[%s0 + $0x28] sm:$0xf]
  %v585 = vld [vmem:[%s0 + $0x2c] sm:$0xf]
  %v586 = vld [vmem:[%s0 + $0x30] sm:$0xf]
  %v587 = vld [vmem:[%s0 + $0x34] sm:$0xf]
  %v588 = vld [vmem:[%s0 + $0x38] sm:$0xf]
  %v589 = vld [vmem:[%s0 + $0x3c] sm:$0xf]
  %v590 = vld [vmem:[#allocation2] sm:$0xff]
  %v591 = vld [vmem:[#allocation2 + $0x8] sm:$0xff]
  %v592 = vld [vmem:[#allocation2 + $0x10] sm:$0xff]
  %v593 = vld [vmem:[#allocation2 + $0x18] sm:$0xff]
  %v594 = vld [vmem:[#allocation2 + $0x20] sm:$0xff]
  %v595 = vld [vmem:[#allocation2 + $0x28] sm:$0xff]
  %v596 = vld [vmem:[#allocation2 + $0x30] sm:$0xff]
  %v597 = vld [vmem:[#allocation2 + $0x38] sm:$0xff]
  %v598 = vld [vmem:[#allocation2 + $0x40] sm:$0xff]
  %v599 = vld [vmem:[#allocation2 + $0x48] sm:$0xff]
  %v600 = vld [vmem:[#allocation2 + $0x50] sm:$0xff]
  %v601 = vld [vmem:[#allocation2 + $0x58] sm:$0xff]
  %v602 = vld [vmem:[#allocation2 + $0x60] sm:$0xff]
  %v603 = vld [vmem:[#allocation2 + $0x68] sm:$0xff]
  %v604 = vld [vmem:[#allocation2 + $0x70] sm:$0xff]
  %v605 = vld [vmem:[#allocation2 + $0x78] sm:$0xff]
  %v606 = vpack.c.bf16 %v591, %v590
  %v607 = vpack.c.bf16 %v593, %v592
  %v608 = vpack.c.bf16 %v595, %v594
  %v609 = vpack.c.bf16 %v597, %v596
  %v610 = vpack.c.bf16 %v599, %v598
  %v611 = vpack.c.bf16 %v601, %v600
  %v612 = vpack.c.bf16 %v603, %v602
  %v613 = vpack.c.bf16 %v605, %v604
  %v630 = vunpack.c.l.b16 %v574
  %v631 = vunpack.c.l.b16 %v575
  %v632 = vunpack.c.l.b16 %v576
  %v633 = vunpack.c.l.b16 %v577
  %v634 = vunpack.c.l.b16 %v578
  %v635 = vunpack.c.l.b16 %v579
  %v636 = vunpack.c.l.b16 %v580
  %v637 = vunpack.c.l.b16 %v581
  %v638 = vunpack.c.l.b16 %v582
  %v639 = vunpack.c.l.b16 %v583
  %v640 = vunpack.c.l.b16 %v584
  %v641 = vunpack.c.l.b16 %v585
  %v642 = vunpack.c.l.b16 %v586
  %v643 = vunpack.c.l.b16 %v587
  %v644 = vunpack.c.l.b16 %v588
  %v645 = vunpack.c.l.b16 %v589
  %v646 = vpack.c.b16 %v631, %v630
  %v647 = vpack.c.b16 %v633, %v632
  %v648 = vpack.c.b16 %v635, %v634
  %v649 = vpack.c.b16 %v637, %v636
  %v650 = vpack.c.b16 %v639, %v638
  %v651 = vpack.c.b16 %v641, %v640
  %v652 = vpack.c.b16 %v643, %v642
  %v653 = vpack.c.b16 %v645, %v644
  %662 = vmatprep.subr.bf16.mxu0 0
  %663 = vmatpush1.bf16.msra.mxu0 %v606
  %664 = vmatprep.subr.bf16.mxu0 0
  %665 = vmatpush1.bf16.msra.mxu0 %v607
  %666 = vmatprep.subr.bf16.mxu0 0
  %667 = vmatpush1.bf16.msra.mxu0 %v608
  %668 = vmatprep.subr.bf16.mxu0 0
  %669 = vmatpush1.bf16.msra.mxu0 %v609
  %670 = vmatprep.subr.bf16.mxu0 0
  %671 = vmatpush1.bf16.msra.mxu0 %v610
  %672 = vmatprep.subr.bf16.mxu0 0
  %673 = vmatpush1.bf16.msra.mxu0 %v611
  %674 = vmatprep.subr.bf16.mxu0 0
  %675 = vmatpush1.bf16.msra.mxu0 %v612
  %676 = vmatprep.subr.bf16.mxu0 0
  %677 = vmatpush1.bf16.msra.mxu0 %v613
  %678 = vmatprep.subr.bf16.mxu0 0
  %679 = vmatpush1.bf16.msra.mxu0 0
  %680 = vmatprep.subr.bf16.mxu0 0
  %681 = vmatpush1.bf16.msra.mxu0 0
  %682 = vmatprep.subr.bf16.mxu0 0
  %683 = vmatpush1.bf16.msra.mxu0 0
  %684 = vmatprep.subr.bf16.mxu0 0
  %685 = vmatpush1.bf16.msra.mxu0 0
  %686 = vmatprep.subr.bf16.mxu0 0
  %687 = vmatpush1.bf16.msra.mxu0 0
  %688 = vmatprep.subr.bf16.mxu0 0
  %689 = vmatpush1.bf16.msra.mxu0 0
  %690 = vmatprep.subr.bf16.mxu0 0
  %691 = vmatpush1.bf16.msra.mxu0 0
  %692 = vmatprep.subr.bf16.mxu0 0
  %693 = vmatpush1.bf16.msra.mxu0 0
  %694 = vmatprep.mubr.bf16.mxu0 0
  %695 = vmatmul.mubr.bf16.gmra.mrb[0].mxu0 %v646
  %v696 = vpop.f32.mrb[0].mxu0
  %v697 = vadd.f32 0.0, %v696
  %v698 = vpop.f32.mrb[0].mxu0
  %v699 = vpop.f32.mrb[0].mxu0
  %v700 = vadd.f32 0.0, %v699
  %v701 = vpop.f32.mrb[0].mxu0
  %702 = vmatprep.mubr.bf16.mxu0 0
  %703 = vmatmul.mubr.bf16.gmra.mrb[0].mxu0 %v647
  %v704 = vpop.f32.mrb[0].mxu0
  %v705 = vadd.f32 0.0, %v704
  %v706 = vpop.f32.mrb[0].mxu0
  %v707 = vpop.f32.mrb[0].mxu0
  %v708 = vadd.f32 0.0, %v707
  %v709 = vpop.f32.mrb[0].mxu0
  %710 = vmatprep.mubr.bf16.mxu0 0
  %711 = vmatmul.mubr.bf16.gmra.mrb[0].mxu0 %v648
  %v712 = vpop.f32.mrb[0].mxu0
  %v713 = vadd.f32 0.0, %v712
  %v714 = vpop.f32.mrb[0].mxu0
  %v715 = vpop.f32.mrb[0].mxu0
  %v716 = vadd.f32 0.0, %v715
  %v717 = vpop.f32.mrb[0].mxu0
  %718 = vmatprep.mubr.bf16.mxu0 0
  %719 = vmatmul.mubr.bf16.gmra.mrb[0].mxu0 %v649
  %v720 = vpop.f32.mrb[0].mxu0
  %v721 = vadd.f32 0.0, %v720
  %v722 = vpop.f32.mrb[0].mxu0
  %v723 = vpop.f32.mrb[0].mxu0
  %v724 = vadd.f32 0.0, %v723
  %v725 = vpop.f32.mrb[0].mxu0
  %726 = vmatprep.mubr.bf16.mxu0 0
  %727 = vmatmul.mubr.bf16.gmra.mrb[0].mxu0 %v650
  %v728 = vpop.f32.mrb[0].mxu0
  %v729 = vadd.f32 0.0, %v728
  %v730 = vpop.f32.mrb[0].mxu0
  %v731 = vpop.f32.mrb[0].mxu0
  %v732 = vadd.f32 0.0, %v731
  %v733 = vpop.f32.mrb[0].mxu0
  %734 = vmatprep.mubr.bf16.mxu0 0
  %735 = vmatmul.mubr.bf16.gmra.mrb[0].mxu0 %v651
  %v736 = vpop.f32.mrb[0].mxu0
  %v737 = vadd.f32 0.0, %v736
  %v738 = vpop.f32.mrb[0].mxu0
  %v739 = vpop.f32.mrb[0].mxu0
  %v740 = vadd.f32 0.0, %v739
  %v741 = vpop.f32.mrb[0].mxu0
  %742 = vmatprep.mubr.bf16.mxu0 0
  %743 = vmatmul.mubr.bf16.gmra.mrb[0].mxu0 %v652
  %v744 = vpop.f32.mrb[0].mxu0
  %v745 = vadd.f32 0.0, %v744
  %v746 = vpop.f32.mrb[0].mxu0
  %v747 = vpop.f32.mrb[0].mxu0
  %v748 = vadd.f32 0.0, %v747
  %v749 = vpop.f32.mrb[0].mxu0
  %750 = vmatprep.mubr.bf16.mxu0 0
  %751 = vmatmul.mubr.bf16.gmra.mrb[0].mxu0 %v653
  %v752 = vpop.f32.mrb[0].mxu0
  %v753 = vadd.f32 0.0, %v752
  %v754 = vpop.f32.mrb[0].mxu0
  %v755 = vpop.f32.mrb[0].mxu0
  %v756 = vadd.f32 0.0, %v755
  %v757 = vpop.f32.mrb[0].mxu0
  %758 = vdwg.mxu0
  %759 = vst [vmem:[#allocation2] sm:$0xff] %v697
  %760 = vst [vmem:[#allocation2 + $0x8] sm:$0xff] %v700
  %761 = vst [vmem:[#allocation2 + $0x10] sm:$0xff] %v705
  %762 = vst [vmem:[#allocation2 + $0x18] sm:$0xff] %v708
  %763 = vst [vmem:[#allocation2 + $0x20] sm:$0xff] %v713
  %764 = vst [vmem:[#allocation2 + $0x28] sm:$0xff] %v716
  %765 = vst [vmem:[#allocation2 + $0x30] sm:$0xff] %v721
  %766 = vst [vmem:[#allocation2 + $0x38] sm:$0xff] %v724
  %767 = vst [vmem:[#allocation2 + $0x40] sm:$0xff] %v729
  %768 = vst [vmem:[#allocation2 + $0x48] sm:$0xff] %v732
  %769 = vst [vmem:[#allocation2 + $0x50] sm:$0xff] %v737
  %770 = vst [vmem:[#allocation2 + $0x58] sm:$0xff] %v740
  %771 = vst [vmem:[#allocation2 + $0x60] sm:$0xff] %v745
  %772 = vst [vmem:[#allocation2 + $0x68] sm:$0xff] %v748
  %773 = vst [vmem:[#allocation2 + $0x70] sm:$0xff] %v753
  %774 = vst [vmem:[#allocation2 + $0x78] sm:$0xff] %v756
  %v775 = vld [vmem:[%s2] sm:$0xff]
  %v776 = vld [vmem:[%s2 + $0x8] sm:$0xff]
  %v777 = vld [vmem:[%s2 + $0x10] sm:$0xff]
  %v778 = vld [vmem:[%s2 + $0x18] sm:$0xff]
  %v779 = vld [vmem:[%s2 + $0x20] sm:$0xff]
  %v780 = vld [vmem:[%s2 + $0x28] sm:$0xff]
  %v781 = vld [vmem:[%s2 + $0x30] sm:$0xff]
  %v782 = vld [vmem:[%s2 + $0x38] sm:$0xff]
  %v783 = vld [vmem:[%s2 + $0x40] sm:$0xff]
  %v784 = vld [vmem:[%s2 + $0x48] sm:$0xff]
  %v785 = vld [vmem:[%s2 + $0x50] sm:$0xff]
  %v786 = vld [vmem:[%s2 + $0x58] sm:$0xff]
  %v787 = vld [vmem:[%s2 + $0x60] sm:$0xff]
  %v788 = vld [vmem:[%s2 + $0x68] sm:$0xff]
  %v789 = vld [vmem:[%s2 + $0x70] sm:$0xff]
  %v790 = vld [vmem:[%s2 + $0x78] sm:$0xff]
  %v791 = vadd.f32 %v775, %v697
  %v792 = vadd.f32 %v776, %v700
  %v793 = vadd.f32 %v777, %v705
  %v794 = vadd.f32 %v778, %v708
  %v795 = vadd.f32 %v779, %v713
  %v796 = vadd.f32 %v780, %v716
  %v797 = vadd.f32 %v781, %v721
  %v798 = vadd.f32 %v782, %v724
  %v799 = vadd.f32 %v783, %v729
  %v800 = vadd.f32 %v784, %v732
  %v801 = vadd.f32 %v785, %v737
  %v802 = vadd.f32 %v786, %v740
  %v803 = vadd.f32 %v787, %v745
  %v804 = vadd.f32 %v788, %v748
  %v805 = vadd.f32 %v789, %v753
  %v806 = vadd.f32 %v790, %v756
  %807 = vst [vmem:[%s2] sm:$0xff] %v791
  %808 = vst [vmem:[%s2 + $0x8] sm:$0xff] %v792
  %809 = vst [vmem:[%s2 + $0x10] sm:$0xff] %v793
  %810 = vst [vmem:[%s2 + $0x18] sm:$0xff] %v794
  %811 = vst [vmem:[%s2 + $0x20] sm:$0xff] %v795
  %812 = vst [vmem:[%s2 + $0x28] sm:$0xff] %v796
  %813 = vst [vmem:[%s2 + $0x30] sm:$0xff] %v797
  %814 = vst [vmem:[%s2 + $0x38] sm:$0xff] %v798
  %815 = vst [vmem:[%s2 + $0x40] sm:$0xff] %v799
  %816 = vst [vmem:[%s2 + $0x48] sm:$0xff] %v800
  %817 = vst [vmem:[%s2 + $0x50] sm:$0xff] %v801
  %818 = vst [vmem:[%s2 + $0x58] sm:$0xff] %v802
  %819 = vst [vmem:[%s2 + $0x60] sm:$0xff] %v803
  %820 = vst [vmem:[%s2 + $0x68] sm:$0xff] %v804
  %821 = vst [vmem:[%s2 + $0x70] sm:$0xff] %v805
  %822 = vst [vmem:[%s2 + $0x78] sm:$0xff] %v806
  %v823 = vld [vmem:[%s2] sm:$0xff]
  %v824 = vld [vmem:[%s2 + $0x8] sm:$0xff]
  %v825 = vld [vmem:[%s2 + $0x10] sm:$0xff]
  %v826 = vld [vmem:[%s2 + $0x18] sm:$0xff]
  %v827 = vld [vmem:[%s2 + $0x20] sm:$0xff]
  %v828 = vld [vmem:[%s2 + $0x28] sm:$0xff]
  %v829 = vld [vmem:[%s2 + $0x30] sm:$0xff]
  %v830 = vld [vmem:[%s2 + $0x38] sm:$0xff]
  %v831 = vld [vmem:[%s2 + $0x40] sm:$0xff]
  %v832 = vld [vmem:[%s2 + $0x48] sm:$0xff]
  %v833 = vld [vmem:[%s2 + $0x50] sm:$0xff]
  %v834 = vld [vmem:[%s2 + $0x58] sm:$0xff]
  %v835 = vld [vmem:[%s2 + $0x60] sm:$0xff]
  %v836 = vld [vmem:[%s2 + $0x68] sm:$0xff]
  %v837 = vld [vmem:[%s2 + $0x70] sm:$0xff]
  %v838 = vld [vmem:[%s2 + $0x78] sm:$0xff]
  %v839 = vmul.f32 %v823, 0.25
  %v840 = vmul.f32 %v824, 0.25
  %v841 = vmul.f32 %v825, 0.25
  %v842 = vmul.f32 %v826, 0.25
  %v843 = vmul.f32 %v827, 0.25
  %v844 = vmul.f32 %v828, 0.25
  %v845 = vmul.f32 %v829, 0.25
  %v846 = vmul.f32 %v830, 0.25
  %v847 = vmul.f32 %v831, 0.25
  %v848 = vmul.f32 %v832, 0.25
  %v849 = vmul.f32 %v833, 0.25
  %v850 = vmul.f32 %v834, 0.25
  %v851 = vmul.f32 %v835, 0.25
  %v852 = vmul.f32 %v836, 0.25
  %v853 = vmul.f32 %v837, 0.25
  %v854 = vmul.f32 %v838, 0.25
  %855 = vst [vmem:[%s2] sm:$0xff] %v839
  %856 = vst [vmem:[%s2 + $0x8] sm:$0xff] %v840
  %857 = vst [vmem:[%s2 + $0x10] sm:$0xff] %v841
  %858 = vst [vmem:[%s2 + $0x18] sm:$0xff] %v842
  %859 = vst [vmem:[%s2 + $0x20] sm:$0xff] %v843
  %860 = vst [vmem:[%s2 + $0x28] sm:$0xff] %v844
  %861 = vst [vmem:[%s2 + $0x30] sm:$0xff] %v845
  %862 = vst [vmem:[%s2 + $0x38] sm:$0xff] %v846
  %863 = vst [vmem:[%s2 + $0x40] sm:$0xff] %v847
  %864 = vst [vmem:[%s2 + $0x48] sm:$0xff] %v848
  %865 = vst [vmem:[%s2 + $0x50] sm:$0xff] %v849
  %866 = vst [vmem:[%s2 + $0x58] sm:$0xff] %v850
  %867 = vst [vmem:[%s2 + $0x60] sm:$0xff] %v851
  %868 = vst [vmem:[%s2 + $0x68] sm:$0xff] %v852
  %869 = vst [vmem:[%s2 + $0x70] sm:$0xff] %v853
  %870 = vst [vmem:[%s2 + $0x78] sm:$0xff] %v854
  // Predicated region
  $region10: #{_lightgcn_forward_impl.2} parent=0 // pred_check
    _
  $region11: #{_lightgcn_forward_impl.2} parent=0 // pred_check_branch
    %872 = sbr.rel (0) target = $region13
  $region12: #{_lightgcn_forward_impl.2} parent=0 // pred_region
    _
  $region13: #{_lightgcn_forward_impl.2} parent=0 // pred_fallthru
    _
  // Predicated region
  $region14: #{_lightgcn_forward_impl.2} parent=0 // pred_check
    _
  $region15: #{_lightgcn_forward_impl.2} parent=0 // pred_check_branch
    %874 = sbr.rel (0) target = $region17
  $region16: #{_lightgcn_forward_impl.2} parent=0 // pred_region
    _
  $region17: #{_lightgcn_forward_impl.2} parent=0 // pred_fallthru
    _

</llo_original>
